<compile_context>
chip_gen: v5e
topology: v5e:2x2
jax: 0.10.0
libtpu: 0.0.40
codegen_flags: <defaults>
</compile_context>

<pallas_src>
import functools
import math

import jax
import jax.numpy as jnp
from jax.experimental import pallas as pl
from jax.experimental.pallas import tpu as pltpu

INPUT_NODE = 2
NEURONS = 512
NSTEPS = 801
OUTPUT_NODE = NSTEPS - 1  # 800


def _round_up(x, m):
    return (x + m - 1) // m * m


def _choose_batch_tile(B, tb):
    """Balanced batch tile (multiple of 8).

    Keeps >= 2 grid steps whenever B >= 16 so the 'parallel' batch axis can shard
    across both v7x TensorCores, and balances tiles so padding waste never exceeds
    one sublane group per tile.
    """
    n = max(1, math.ceil(B / tb))
    if n < 2 and B >= 16:
        n = 2
    return _round_up(math.ceil(B / n), 8)


def mlp_kernel(x_ref, w1_ref, b1_ref, w2_ref, b2_ref, w3_ref, b3_ref,
               w4_ref, b4_ref, o_ref):
    # All four linears + ReLUs fused per batch tile; weights are resident in VMEM
    # (constant index_map) across grid steps.
    x = x_ref[...]            # (tb, 2)  f32
    w1 = w1_ref[...]          # (2, H)   f32

    # fc1: K == 2, a full MXU pass would be ~99% padding -> two VPU rank-1 FMAs.
    h = x[:, 0:1] * w1[0:1, :] + x[:, 1:2] * w1[1:2, :] + b1_ref[...]
    h = jnp.maximum(h, 0.0)

    cdt = w2_ref.dtype        # MXU input dtype (bf16 or f32); accumulation is f32.

    h = jnp.dot(h.astype(cdt), w2_ref[...],
                preferred_element_type=jnp.float32) + b2_ref[...]
    h = jnp.maximum(h, 0.0)

    h = jnp.dot(h.astype(cdt), w3_ref[...],
                preferred_element_type=jnp.float32) + b3_ref[...]
    h = jnp.maximum(h, 0.0)

    out = jnp.dot(h.astype(cdt), w4_ref[...],
                  preferred_element_type=jnp.float32) + b4_ref[...]
    o_ref[...] = out.astype(o_ref.dtype)


def prepare_params(params, *, use_bf16=True):
    """One-time weight prep OUTSIDE the per-call path.

    Casts the three wide-layer weights to bf16 for the MXU (fc1 stays f32 on the VPU;
    biases stay f32 since they are added to the f32 accumulator).
    """
    w1, b1, w2, b2, w3, b3, w4, b4 = params
    cdt = jnp.bfloat16 if use_bf16 else jnp.float32
    return (w1, b1,
            w2.astype(cdt), b2,
            w3.astype(cdt), b3,
            w4.astype(cdt), b4)


@functools.partial(jax.jit, static_argnames=("tb",))
def mlp_forward(x, w1, b1, w2, b2, w3, b3, w4, b4, *, tb=512):
    """Fused MLP forward.  Weights must already be prepared (see prepare_params)."""
    B, IN = x.shape
    H = w1.shape[1]
    OUT = w4.shape[1]

    # Pad batch to a multiple of a balanced batch tile (only when needed).
    tb_eff = _choose_batch_tile(B, tb)
    Bp = _round_up(B, tb_eff)
    if Bp != B:
        x = jnp.pad(x, ((0, Bp - B), (0, 0)))

    grid = (Bp // tb_eff,)

    def resident(shape):
        # Whole-array block with a constant index_map: DMA'd once, resident in VMEM.
        # (pipeline_mode=pl.Buffered(1) would halve their VMEM footprint, but the
        #  default double-buffer comfortably fits, so keep the default for robustness.)
        return pl.BlockSpec(shape, lambda i: (0, 0))

    out = pl.pallas_call(
        mlp_kernel,
        out_shape=jax.ShapeDtypeStruct((Bp, OUT), jnp.float32),
        grid_spec=pltpu.PrefetchScalarGridSpec(
            num_scalar_prefetch=0,
            grid=grid,
            in_specs=[
                pl.BlockSpec((tb_eff, IN), lambda i: (i, 0)),  # x tile
                resident((IN, H)),  resident((1, H)),          # fc1 (f32, VPU)
                resident((H, H)),   resident((1, H)),          # fc2
                resident((H, H)),   resident((1, H)),          # fc3
                resident((H, OUT)), resident((1, OUT)),        # fc4 (full 800-wide)
            ],
            out_specs=pl.BlockSpec((tb_eff, OUT), lambda i: (i, 0)),
        ),
        compiler_params=pltpu.CompilerParams(
            dimension_semantics=("parallel",),   # shard batch tiles across v7x TCs
            vmem_limit_bytes=32 << 20,
        ),
    )(x, w1, b1, w2, b2, w3, b3, w4, b4)

    if Bp != B:
        out = out[:B]        # only pay the de-pad copy when padding was applied
    return out


def init_params(key):
    """Deterministic init mimicking nn.Linear default: U(-1/sqrt(fan_in), 1/sqrt(fan_in))."""
    def linear(k, fan_in, fan_out):
        kw, kb = jax.random.split(k)
        bound = 1.0 / jnp.sqrt(jnp.float32(fan_in))
        w = jax.random.uniform(kw, (fan_in, fan_out), jnp.float32, -bound, bound)
        b = jax.random.uniform(kb, (1, fan_out), jnp.float32, -bound, bound)
        return w, b

    k1, k2, k3, k4 = jax.random.split(key, 4)
    w1, b1 = linear(k1, INPUT_NODE, NEURONS)
    w2, b2 = linear(k2, NEURONS, NEURONS)
    w3, b3 = linear(k3, NEURONS, NEURONS)
    w4, b4 = linear(k4, NEURONS, OUTPUT_NODE)
    return (w1, b1, w2, b2, w3, b3, w4, b4)


def mlp_reference(x, w1, b1, w2, b2, w3, b3, w4, b4):
    h = jnp.maximum(x @ w1 + b1, 0.0)
    h = jnp.maximum(h @ w2 + b2, 0.0)
    h = jnp.maximum(h @ w3 + b3, 0.0)
    return h @ w4 + b4


if __name__ == "__main__":
    key = jax.random.PRNGKey(0)
    kx, kp = jax.random.split(key)

    B = 16  # small batch -> 2 grid steps of 8 rows (exercises the "parallel" axis)
    x = jax.random.normal(kx, (B, INPUT_NODE), jnp.float32)
    params = init_params(kp)
    ref = mlp_reference(x, *params)

    # f32 path: tight check of kernel semantics.
    params_f32 = prepare_params(params, use_bf16=False)
    out_f32 = jax.block_until_ready(mlp_forward(x, *params_f32))
    assert out_f32.shape == (B, OUTPUT_NODE)
    assert jnp.allclose(out_f32, ref, atol=1e-4, rtol=1e-4), "f32 mismatch vs reference"

    # bf16 matmul path (f32 accumulation): looser tolerance.
    params_bf16 = prepare_params(params, use_bf16=True)
    out_bf16 = jax.block_until_ready(mlp_forward(x, *params_bf16))
    assert out_bf16.shape == (B, OUTPUT_NODE)
    assert jnp.allclose(out_bf16, ref, atol=5e-2, rtol=5e-2), "bf16 mismatch vs reference"

    # Odd / tiny batch exercises the batch-padding + conditional de-pad path.
    x_small = jax.random.normal(kx, (5, INPUT_NODE), jnp.float32)
    out_small = jax.block_until_ready(mlp_forward(x_small, *params_f32))
    ref_small = mlp_reference(x_small, *params)
    assert out_small.shape == (5, OUTPUT_NODE)
    assert jnp.allclose(out_small, ref_small, atol=1e-4, rtol=1e-4), "small-batch mismatch"

    print("KERNEL_OK")
</pallas_src>

<mosaic_0001>
module attributes {stable_mosaic.version = 11 : i64} {
  func.func @mlp_kernel(%arg0: i32, %arg1: memref<8x2xf32, #tpu.memory_space<vmem>>, %arg2: memref<2x512xf32, #tpu.memory_space<vmem>>, %arg3: memref<1x512xf32, #tpu.memory_space<vmem>>, %arg4: memref<512x512xf32, #tpu.memory_space<vmem>>, %arg5: memref<1x512xf32, #tpu.memory_space<vmem>>, %arg6: memref<512x512xf32, #tpu.memory_space<vmem>>, %arg7: memref<1x512xf32, #tpu.memory_space<vmem>>, %arg8: memref<512x800xf32, #tpu.memory_space<vmem>>, %arg9: memref<1x800xf32, #tpu.memory_space<vmem>>, %arg10: memref<8x800xf32, #tpu.memory_space<vmem>>) attributes {dimension_semantics = [#tpu.dimension_semantics<parallel>], iteration_bounds = array<i64: 2>, scalar_prefetch = 0 : i64, scratch_operands = 0 : i64, tpu.core_type = #tpu.core_type<tc>, window_params = [{transform_indices = @transform_0, window_bounds = array<i64: 8, 2>}, {pipeline_mode = #tpu.pipeline_mode<synchronous>, transform_indices = @transform_1, window_bounds = array<i64: 2, 512>}, {pipeline_mode = #tpu.pipeline_mode<synchronous>, transform_indices = @transform_2, window_bounds = array<i64: 1, 512>}, {pipeline_mode = #tpu.pipeline_mode<synchronous>, transform_indices = @transform_3, window_bounds = array<i64: 512, 512>}, {pipeline_mode = #tpu.pipeline_mode<synchronous>, transform_indices = @transform_4, window_bounds = array<i64: 1, 512>}, {pipeline_mode = #tpu.pipeline_mode<synchronous>, transform_indices = @transform_5, window_bounds = array<i64: 512, 512>}, {pipeline_mode = #tpu.pipeline_mode<synchronous>, transform_indices = @transform_6, window_bounds = array<i64: 1, 512>}, {pipeline_mode = #tpu.pipeline_mode<synchronous>, transform_indices = @transform_7, window_bounds = array<i64: 512, 800>}, {pipeline_mode = #tpu.pipeline_mode<synchronous>, transform_indices = @transform_8, window_bounds = array<i64: 1, 800>}, {transform_indices = @transform_9, window_bounds = array<i64: 8, 800>}]} {
    %c0 = arith.constant 0 : index
    %c0_0 = arith.constant 0 : index
    %0 = vector.load %arg1[%c0, %c0_0] : memref<8x2xf32, #tpu.memory_space<vmem>>, vector<8x2xf32>
    %c0_1 = arith.constant 0 : index
    %c0_2 = arith.constant 0 : index
    %1 = vector.load %arg2[%c0_1, %c0_2] : memref<2x512xf32, #tpu.memory_space<vmem>>, vector<2x512xf32>
    %2 = vector.extract_strided_slice %0 {offsets = [0, 0], sizes = [8, 1], strides = [1, 1]} : vector<8x2xf32> to vector<8x1xf32>
    %3 = vector.extract_strided_slice %1 {offsets = [0, 0], sizes = [1, 512], strides = [1, 1]} : vector<2x512xf32> to vector<1x512xf32>
    %4 = vector.broadcast %2 : vector<8x1xf32> to vector<8x512xf32>
    %5 = vector.broadcast %3 : vector<1x512xf32> to vector<8x512xf32>
    %6 = arith.mulf %4, %5 : vector<8x512xf32>
    %7 = vector.extract_strided_slice %0 {offsets = [0, 1], sizes = [8, 1], strides = [1, 1]} : vector<8x2xf32> to vector<8x1xf32>
    %8 = vector.extract_strided_slice %1 {offsets = [1, 0], sizes = [1, 512], strides = [1, 1]} : vector<2x512xf32> to vector<1x512xf32>
    %9 = vector.broadcast %7 : vector<8x1xf32> to vector<8x512xf32>
    %10 = vector.broadcast %8 : vector<1x512xf32> to vector<8x512xf32>
    %11 = arith.mulf %9, %10 : vector<8x512xf32>
    %12 = arith.addf %6, %11 : vector<8x512xf32>
    %c0_3 = arith.constant 0 : index
    %c0_4 = arith.constant 0 : index
    %13 = vector.load %arg3[%c0_3, %c0_4] : memref<1x512xf32, #tpu.memory_space<vmem>>, vector<1x512xf32>
    %14 = vector.broadcast %13 : vector<1x512xf32> to vector<8x512xf32>
    %15 = arith.addf %12, %14 : vector<8x512xf32>
    %cst = arith.constant 0.000000e+00 : f32
    %16 = vector.broadcast %cst : f32 to vector<8x512xf32>
    %17 = arith.maximumf %15, %16 : vector<8x512xf32>
    %c0_5 = arith.constant 0 : index
    %c0_6 = arith.constant 0 : index
    %18 = vector.load %arg4[%c0_5, %c0_6] : memref<512x512xf32, #tpu.memory_space<vmem>>, vector<512x512xf32>
    %cst_7 = arith.constant dense<0.000000e+00> : vector<8x512xf32>
    %19 = tpu.matmul %17, %18, %cst_7 {dimension_numbers = #tpu.dot_dimension_numbers<[1], [0], [0], [1], [0, 0, 1, 1], [], []>} : vector<8x512xf32>, vector<512x512xf32>, vector<8x512xf32> -> vector<8x512xf32>
    %c0_8 = arith.constant 0 : index
    %c0_9 = arith.constant 0 : index
    %20 = vector.load %arg5[%c0_8, %c0_9] : memref<1x512xf32, #tpu.memory_space<vmem>>, vector<1x512xf32>
    %21 = vector.broadcast %20 : vector<1x512xf32> to vector<8x512xf32>
    %22 = arith.addf %19, %21 : vector<8x512xf32>
    %cst_10 = arith.constant 0.000000e+00 : f32
    %23 = vector.broadcast %cst_10 : f32 to vector<8x512xf32>
    %24 = arith.maximumf %22, %23 : vector<8x512xf32>
    %c0_11 = arith.constant 0 : index
    %c0_12 = arith.constant 0 : index
    %25 = vector.load %arg6[%c0_11, %c0_12] : memref<512x512xf32, #tpu.memory_space<vmem>>, vector<512x512xf32>
    %cst_13 = arith.constant dense<0.000000e+00> : vector<8x512xf32>
    %26 = tpu.matmul %24, %25, %cst_13 {dimension_numbers = #tpu.dot_dimension_numbers<[1], [0], [0], [1], [0, 0, 1, 1], [], []>} : vector<8x512xf32>, vector<512x512xf32>, vector<8x512xf32> -> vector<8x512xf32>
    %c0_14 = arith.constant 0 : index
    %c0_15 = arith.constant 0 : index
    %27 = vector.load %arg7[%c0_14, %c0_15] : memref<1x512xf32, #tpu.memory_space<vmem>>, vector<1x512xf32>
    %28 = vector.broadcast %27 : vector<1x512xf32> to vector<8x512xf32>
    %29 = arith.addf %26, %28 : vector<8x512xf32>
    %cst_16 = arith.constant 0.000000e+00 : f32
    %30 = vector.broadcast %cst_16 : f32 to vector<8x512xf32>
    %31 = arith.maximumf %29, %30 : vector<8x512xf32>
    %c0_17 = arith.constant 0 : index
    %c0_18 = arith.constant 0 : index
    %32 = vector.load %arg8[%c0_17, %c0_18] : memref<512x800xf32, #tpu.memory_space<vmem>>, vector<512x800xf32>
    %cst_19 = arith.constant dense<0.000000e+00> : vector<8x800xf32>
    %33 = tpu.matmul %31, %32, %cst_19 {dimension_numbers = #tpu.dot_dimension_numbers<[1], [0], [0], [1], [0, 0, 1, 1], [], []>} : vector<8x512xf32>, vector<512x800xf32>, vector<8x800xf32> -> vector<8x800xf32>
    %c0_20 = arith.constant 0 : index
    %c0_21 = arith.constant 0 : index
    %34 = vector.load %arg9[%c0_20, %c0_21] : memref<1x800xf32, #tpu.memory_space<vmem>>, vector<1x800xf32>
    %35 = vector.broadcast %34 : vector<1x800xf32> to vector<8x800xf32>
    %36 = arith.addf %33, %35 : vector<8x800xf32>
    %c0_22 = arith.constant 0 : index
    %c0_23 = arith.constant 0 : index
    %37 = vector.load %arg10[%c0_22, %c0_23] : memref<8x800xf32, #tpu.memory_space<vmem>>, vector<8x800xf32>
    tpu.vector_store %arg10[%c0_22, %c0_23], %36 {strides = array<i32>} : memref<8x800xf32, #tpu.memory_space<vmem>>, vector<8x800xf32>,
    return
  }
  func.func @transform_0(%arg0: i32) -> (i32, i32) {
    %c0_i32 = arith.constant 0 : i32
    %c0_i32_0 = arith.constant 0 : i32
    return %arg0, %c0_i32 : i32, i32
  }
  func.func @transform_1(%arg0: i32) -> (i32, i32) {
    %c0_i32 = arith.constant 0 : i32
    %c0_i32_0 = arith.constant 0 : i32
    %c0_i32_1 = arith.constant 0 : i32
    return %c0_i32, %c0_i32_0 : i32, i32
  }
  func.func @transform_2(%arg0: i32) -> (i32, i32) {
    %c0_i32 = arith.constant 0 : i32
    %c0_i32_0 = arith.constant 0 : i32
    %c0_i32_1 = arith.constant 0 : i32
    return %c0_i32, %c0_i32_0 : i32, i32
  }
  func.func @transform_3(%arg0: i32) -> (i32, i32) {
    %c0_i32 = arith.constant 0 : i32
    %c0_i32_0 = arith.constant 0 : i32
    %c0_i32_1 = arith.constant 0 : i32
    return %c0_i32, %c0_i32_0 : i32, i32
  }
  func.func @transform_4(%arg0: i32) -> (i32, i32) {
    %c0_i32 = arith.constant 0 : i32
    %c0_i32_0 = arith.constant 0 : i32
    %c0_i32_1 = arith.constant 0 : i32
    return %c0_i32, %c0_i32_0 : i32, i32
  }
  func.func @transform_5(%arg0: i32) -> (i32, i32) {
    %c0_i32 = arith.constant 0 : i32
    %c0_i32_0 = arith.constant 0 : i32
    %c0_i32_1 = arith.constant 0 : i32
    return %c0_i32, %c0_i32_0 : i32, i32
  }
  func.func @transform_6(%arg0: i32) -> (i32, i32) {
    %c0_i32 = arith.constant 0 : i32
    %c0_i32_0 = arith.constant 0 : i32
    %c0_i32_1 = arith.constant 0 : i32
    return %c0_i32, %c0_i32_0 : i32, i32
  }
  func.func @transform_7(%arg0: i32) -> (i32, i32) {
    %c0_i32 = arith.constant 0 : i32
    %c0_i32_0 = arith.constant 0 : i32
    %c0_i32_1 = arith.constant 0 : i32
    return %c0_i32, %c0_i32_0 : i32, i32
  }
  func.func @transform_8(%arg0: i32) -> (i32, i32) {
    %c0_i32 = arith.constant 0 : i32
    %c0_i32_0 = arith.constant 0 : i32
    %c0_i32_1 = arith.constant 0 : i32
    return %c0_i32, %c0_i32_0 : i32, i32
  }
  func.func @transform_9(%arg0: i32) -> (i32, i32) {
    %c0_i32 = arith.constant 0 : i32
    %c0_i32_0 = arith.constant 0 : i32
    return %arg0, %c0_i32 : i32, i32
  }
}

</mosaic_0001>

<llo_original>
// kernel: mlp_forward.1
$region0: #{mlp_forward.1}
  #allocation0 [shape = 'u32[]', space=smem, size = 0x4, offset = 0x4, fixed_abs, tag = 'smem constant byte address 0x4 - core index']
  #allocation1 [shape = 'u32[72,128]{1,0:T(1,128)}', space=vmem, size = 0x9000, scoped, tag = 'internal scratch']
  %s0 = inlined_call_operand.vmem [shape: f32[16,2], index: 0, kind: input, shape index: {}]
  %s1 = inlined_call_operand.vmem [shape: f32[2,512], index: 1, kind: input, shape index: {}]
  %s2 = inlined_call_operand.vmem [shape: f32[1,512], index: 2, kind: input, shape index: {}]
  %s3 = inlined_call_operand.vmem [shape: f32[512,512], index: 3, kind: input, shape index: {}]
  %s4 = inlined_call_operand.vmem [shape: f32[1,512], index: 4, kind: input, shape index: {}]
  %s5 = inlined_call_operand.vmem [shape: f32[512,512], index: 5, kind: input, shape index: {}]
  %s6 = inlined_call_operand.vmem [shape: f32[1,512], index: 6, kind: input, shape index: {}]
  %s7 = inlined_call_operand.vmem [shape: f32[512,800], index: 7, kind: input, shape index: {}]
  %s8 = inlined_call_operand.vmem [shape: f32[1,800], index: 8, kind: input, shape index: {}]
  %s9 = inlined_call_operand.hbm [shape: f32[16,800], index: 9, kind: output, shape index: {}]
  %s10 = sld [smem:[#allocation0]]
  $region69: #{mlp_forward.1} parent=0
    _
  %s12 = ssub.s32 1, %s10
  %s13 = scalar_select 0, %s12, %s10
  $region1: #{mlp_forward.1} parent=0
    #allocation2 [shape = 'u8[57344]{0}', space=vmem, size = 0xe000, scoped, tag = 'output window, operand 0']
    #allocation3 [shape = 's32[2]{0}', space=sflag, size = 0x8, scoped, tag = 'scoped memory for mlp_forward.1']
    %14 = vsyncpa [#allocation3], 0
    %s15 = scalar_lea.sflag [#allocation3], 1
    %16 = vsyncpa %s15, 0
    loop: start=0, step=1, limit=4
    $region2: #{mlp_forward.1} parent=1 // loop_pre_header
      _
    $region3: #{mlp_forward.1} parent=1 // loop_header
      %s18 = sphi 0, %s22
      %p19 = scmp.ge.s32.totalorder %s18, 4
      %s28 = sphi 0, %s30
      %s31 = sphi 0, %s28
      %s32 = sphi 0, %s31
      %s48 = sphi 0, %s32
      %s52 = sphi 0, %s52
      %s54 = sphi 0, %s52
      %s55 = sphi 0, %s54
      %s69 = sphi 0, %s55
      %s73 = sphi 0, %s73
      %s75 = sphi 0, %s73
      %s76 = sphi 0, %s75
      %s90 = sphi 0, %s76
      %s94 = sphi 0, %s94
      %s96 = sphi 0, %s94
      %s97 = sphi 0, %s96
      %s111 = sphi 0, %s97
      %s115 = sphi 0, %s115
      %s117 = sphi 0, %s115
      %s118 = sphi 0, %s117
      %s132 = sphi 0, %s118
      %s136 = sphi 0, %s136
      %s138 = sphi 0, %s136
      %s139 = sphi 0, %s138
      %s153 = sphi 0, %s139
      %s157 = sphi 0, %s157
      %s159 = sphi 0, %s157
      %s160 = sphi 0, %s159
      %s174 = sphi 0, %s160
      %s178 = sphi 0, %s178
      %s180 = sphi 0, %s178
      %s181 = sphi 0, %s180
      %s195 = sphi 0, %s181
      %s199 = sphi 0, %s199
      %s201 = sphi 0, %s199
      %s202 = sphi 0, %s201
      %s216 = sphi 0, %s202
      %s222 = sphi 0, %s224
      %s225 = sphi 0, %s222
      %s226 = sphi 0, %s225
      %s242 = sphi 0, %s226
    $region4: #{mlp_forward.1} parent=1 // loop_header_branch
      %21 = sbr.rel (%p19) target = $region8
    $region5: #{mlp_forward.1} parent=1 // loop_body
      %s23 = ssub.s32 %s18, 1
      %s24 = ssub.s32 %s18, 2
      %s25 = sadd.s32 %s18, 1
      %s26 = ssub.s32 %s18, %s25
      %p27 = scmp.eq.s32.totalorder %s26, 0
      %s29 = sadd.s32 %s28, 1
      %s30 = scalar_select %p27, %s28, %s29
      %p33 = pneg %p27
      %p34 = scmp.eq.s32.totalorder %s18, 1
      %p35 = por %p33, %p34
      %p36 = scmp.ne.s32.totalorder %s28, %s31
      %p37 = scmp.eq.s32.totalorder %s18, 0
      %p38 = por %p36, %p37
      %p39 = scmp.ne.s32.totalorder %s28, %s31
      %p40 = scmp.eq.s32.totalorder %s23, 1
      %p41 = por %p39, %p40
      %p42 = scmp.ne.s32.totalorder %s31, %s32
      %p43 = scmp.eq.s32.totalorder %s23, 0
      %p44 = por %p42, %p43
      %p45 = scmp.ne.s32.totalorder %s31, %s32
      %p46 = scmp.eq.s32.totalorder %s24, 1
      %p47 = por %p45, %p46
      %p49 = scmp.ne.s32.totalorder %s32, %s48
      %p50 = scmp.eq.s32.totalorder %s24, 0
      %p51 = por %p49, %p50
      %s53 = sadd.s32 %s52, 1
      %p56 = scmp.eq.s32.totalorder %s18, 1
      %p57 = scmp.ne.s32.totalorder %s52, %s54
      %p58 = scmp.eq.s32.totalorder %s18, 0
      %p59 = por %p57, %p58
      %p60 = scmp.ne.s32.totalorder %s52, %s54
      %p61 = scmp.eq.s32.totalorder %s23, 1
      %p62 = por %p60, %p61
      %p63 = scmp.ne.s32.totalorder %s54, %s55
      %p64 = scmp.eq.s32.totalorder %s23, 0
      %p65 = por %p63, %p64
      %p66 = scmp.ne.s32.totalorder %s54, %s55
      %p67 = scmp.eq.s32.totalorder %s24, 1
      %p68 = por %p66, %p67
      %p70 = scmp.ne.s32.totalorder %s55, %s69
      %p71 = scmp.eq.s32.totalorder %s24, 0
      %p72 = por %p70, %p71
      %s74 = sadd.s32 %s73, 1
      %p77 = scmp.eq.s32.totalorder %s18, 1
      %p78 = scmp.ne.s32.totalorder %s73, %s75
      %p79 = scmp.eq.s32.totalorder %s18, 0
      %p80 = por %p78, %p79
      %p81 = scmp.ne.s32.totalorder %s73, %s75
      %p82 = scmp.eq.s32.totalorder %s23, 1
      %p83 = por %p81, %p82
      %p84 = scmp.ne.s32.totalorder %s75, %s76
      %p85 = scmp.eq.s32.totalorder %s23, 0
      %p86 = por %p84, %p85
      %p87 = scmp.ne.s32.totalorder %s75, %s76
      %p88 = scmp.eq.s32.totalorder %s24, 1
      %p89 = por %p87, %p88
      %p91 = scmp.ne.s32.totalorder %s76, %s90
      %p92 = scmp.eq.s32.totalorder %s24, 0
      %p93 = por %p91, %p92
      %s95 = sadd.s32 %s94, 1
      %p98 = scmp.eq.s32.totalorder %s18, 1
      %p99 = scmp.ne.s32.totalorder %s94, %s96
      %p100 = scmp.eq.s32.totalorder %s18, 0
      %p101 = por %p99, %p100
      %p102 = scmp.ne.s32.totalorder %s94, %s96
      %p103 = scmp.eq.s32.totalorder %s23, 1
      %p104 = por %p102, %p103
      %p105 = scmp.ne.s32.totalorder %s96, %s97
      %p106 = scmp.eq.s32.totalorder %s23, 0
      %p107 = por %p105, %p106
      %p108 = scmp.ne.s32.totalorder %s96, %s97
      %p109 = scmp.eq.s32.totalorder %s24, 1
      %p110 = por %p108, %p109
      %p112 = scmp.ne.s32.totalorder %s97, %s111
      %p113 = scmp.eq.s32.totalorder %s24, 0
      %p114 = por %p112, %p113
      %s116 = sadd.s32 %s115, 1
      %p119 = scmp.eq.s32.totalorder %s18, 1
      %p120 = scmp.ne.s32.totalorder %s115, %s117
      %p121 = scmp.eq.s32.totalorder %s18, 0
      %p122 = por %p120, %p121
      %p123 = scmp.ne.s32.totalorder %s115, %s117
      %p124 = scmp.eq.s32.totalorder %s23, 1
      %p125 = por %p123, %p124
      %p126 = scmp.ne.s32.totalorder %s117, %s118
      %p127 = scmp.eq.s32.totalorder %s23, 0
      %p128 = por %p126, %p127
      %p129 = scmp.ne.s32.totalorder %s117, %s118
      %p130 = scmp.eq.s32.totalorder %s24, 1
      %p131 = por %p129, %p130
      %p133 = scmp.ne.s32.totalorder %s118, %s132
      %p134 = scmp.eq.s32.totalorder %s24, 0
      %p135 = por %p133, %p134
      %s137 = sadd.s32 %s136, 1
      %p140 = scmp.eq.s32.totalorder %s18, 1
      %p141 = scmp.ne.s32.totalorder %s136, %s138
      %p142 = scmp.eq.s32.totalorder %s18, 0
      %p143 = por %p141, %p142
      %p144 = scmp.ne.s32.totalorder %s136, %s138
      %p145 = scmp.eq.s32.totalorder %s23, 1
      %p146 = por %p144, %p145
      %p147 = scmp.ne.s32.totalorder %s138, %s139
      %p148 = scmp.eq.s32.totalorder %s23, 0
      %p149 = por %p147, %p148
      %p150 = scmp.ne.s32.totalorder %s138, %s139
      %p151 = scmp.eq.s32.totalorder %s24, 1
      %p152 = por %p150, %p151
      %p154 = scmp.ne.s32.totalorder %s139, %s153
      %p155 = scmp.eq.s32.totalorder %s24, 0
      %p156 = por %p154, %p155
      %s158 = sadd.s32 %s157, 1
      %p161 = scmp.eq.s32.totalorder %s18, 1
      %p162 = scmp.ne.s32.totalorder %s157, %s159
      %p163 = scmp.eq.s32.totalorder %s18, 0
      %p164 = por %p162, %p163
      %p165 = scmp.ne.s32.totalorder %s157, %s159
      %p166 = scmp.eq.s32.totalorder %s23, 1
      %p167 = por %p165, %p166
      %p168 = scmp.ne.s32.totalorder %s159, %s160
      %p169 = scmp.eq.s32.totalorder %s23, 0
      %p170 = por %p168, %p169
      %p171 = scmp.ne.s32.totalorder %s159, %s160
      %p172 = scmp.eq.s32.totalorder %s24, 1
      %p173 = por %p171, %p172
      %p175 = scmp.ne.s32.totalorder %s160, %s174
      %p176 = scmp.eq.s32.totalorder %s24, 0
      %p177 = por %p175, %p176
      %s179 = sadd.s32 %s178, 1
      %p182 = scmp.eq.s32.totalorder %s18, 1
      %p183 = scmp.ne.s32.totalorder %s178, %s180
      %p184 = scmp.eq.s32.totalorder %s18, 0
      %p185 = por %p183, %p184
      %p186 = scmp.ne.s32.totalorder %s178, %s180
      %p187 = scmp.eq.s32.totalorder %s23, 1
      %p188 = por %p186, %p187
      %p189 = scmp.ne.s32.totalorder %s180, %s181
      %p190 = scmp.eq.s32.totalorder %s23, 0
      %p191 = por %p189, %p190
      %p192 = scmp.ne.s32.totalorder %s180, %s181
      %p193 = scmp.eq.s32.totalorder %s24, 1
      %p194 = por %p192, %p193
      %p196 = scmp.ne.s32.totalorder %s181, %s195
      %p197 = scmp.eq.s32.totalorder %s24, 0
      %p198 = por %p196, %p197
      %s200 = sadd.s32 %s199, 1
      %p203 = scmp.eq.s32.totalorder %s18, 1
      %p204 = scmp.ne.s32.totalorder %s199, %s201
      %p205 = scmp.eq.s32.totalorder %s18, 0
      %p206 = por %p204, %p205
      %p207 = scmp.ne.s32.totalorder %s199, %s201
      %p208 = scmp.eq.s32.totalorder %s23, 1
      %p209 = por %p207, %p208
      %p210 = scmp.ne.s32.totalorder %s201, %s202
      %p211 = scmp.eq.s32.totalorder %s23, 0
      %p212 = por %p210, %p211
      %p213 = scmp.ne.s32.totalorder %s201, %s202
      %p214 = scmp.eq.s32.totalorder %s24, 1
      %p215 = por %p213, %p214
      %p217 = scmp.ne.s32.totalorder %s202, %s216
      %p218 = scmp.eq.s32.totalorder %s24, 0
      %p219 = por %p217, %p218
      %s220 = ssub.s32 %s18, %s25
      %p221 = scmp.eq.s32.totalorder %s220, 0
      %s223 = sadd.s32 %s222, 1
      %s224 = scalar_select %p221, %s222, %s223
      %p227 = pneg %p221
      %p228 = scmp.eq.s32.totalorder %s18, 1
      %p229 = por %p227, %p228
      %p230 = scmp.ne.s32.totalorder %s222, %s225
      %p231 = scmp.eq.s32.totalorder %s18, 0
      %p232 = por %p230, %p231
      %p233 = scmp.ne.s32.totalorder %s222, %s225
      %p234 = scmp.eq.s32.totalorder %s23, 1
      %p235 = por %p233, %p234
      %p236 = scmp.ne.s32.totalorder %s225, %s226
      %p237 = scmp.eq.s32.totalorder %s23, 0
      %p238 = por %p236, %p237
      %p239 = scmp.ne.s32.totalorder %s225, %s226
      %p240 = scmp.eq.s32.totalorder %s24, 1
      %p241 = por %p239, %p240
      %p243 = scmp.ne.s32.totalorder %s226, %s242
      %p244 = scmp.eq.s32.totalorder %s24, 0
      %p245 = por %p243, %p244
      %p246 = scmp.le.s32.totalorder 1, %s18
      %p247 = scmp.lt.s32.totalorder %s18, 3
      %p248 = pnand %p246, %p247
      %p249 = pneg %p248
      // Predicated region
      $region9: #{mlp_forward.1} parent=5 // pred_check
        _
      $region10: #{mlp_forward.1} parent=5 // pred_check_branch
        %251 = sbr.rel (%p248) target = $region12
      $region11: #{mlp_forward.1} parent=5 // pred_region
        %s252 = ssub.s32 %s18, 1
        // Predicated region
        $region13: #{mlp_forward.1} parent=11 // pred_check
          %p253 = pneg %p65
        $region14: #{mlp_forward.1} parent=11 // pred_check_branch
          %255 = sbr.rel (%p253) target = $region16
        $region15: #{mlp_forward.1} parent=11 // pred_region
          _
        $region16: #{mlp_forward.1} parent=11 // pred_fallthru
          _
        // Predicated region
        $region17: #{mlp_forward.1} parent=11 // pred_check
          %p256 = pneg %p86
        $region18: #{mlp_forward.1} parent=11 // pred_check_branch
          %258 = sbr.rel (%p256) target = $region20
        $region19: #{mlp_forward.1} parent=11 // pred_region
          _
        $region20: #{mlp_forward.1} parent=11 // pred_fallthru
          _
        // Predicated region
        $region21: #{mlp_forward.1} parent=11 // pred_check
          %p259 = pneg %p107
        $region22: #{mlp_forward.1} parent=11 // pred_check_branch
          %261 = sbr.rel (%p259) target = $region24
        $region23: #{mlp_forward.1} parent=11 // pred_region
          _
        $region24: #{mlp_forward.1} parent=11 // pred_fallthru
          _
        // Predicated region
        $region25: #{mlp_forward.1} parent=11 // pred_check
          %p262 = pneg %p128
        $region26: #{mlp_forward.1} parent=11 // pred_check_branch
          %264 = sbr.rel (%p262) target = $region28
        $region27: #{mlp_forward.1} parent=11 // pred_region
          _
        $region28: #{mlp_forward.1} parent=11 // pred_fallthru
          _
        // Predicated region
        $region29: #{mlp_forward.1} parent=11 // pred_check
          %p265 = pneg %p149
        $region30: #{mlp_forward.1} parent=11 // pred_check_branch
          %267 = sbr.rel (%p265) target = $region32
        $region31: #{mlp_forward.1} parent=11 // pred_region
          _
        $region32: #{mlp_forward.1} parent=11 // pred_fallthru
          _
        // Predicated region
        $region33: #{mlp_forward.1} parent=11 // pred_check
          %p268 = pneg %p170
        $region34: #{mlp_forward.1} parent=11 // pred_check_branch
          %270 = sbr.rel (%p268) target = $region36
        $region35: #{mlp_forward.1} parent=11 // pred_region
          _
        $region36: #{mlp_forward.1} parent=11 // pred_fallthru
          _
        // Predicated region
        $region37: #{mlp_forward.1} parent=11 // pred_check
          %p271 = pneg %p191
        $region38: #{mlp_forward.1} parent=11 // pred_check_branch
          %273 = sbr.rel (%p271) target = $region40
        $region39: #{mlp_forward.1} parent=11 // pred_region
          _
        $region40: #{mlp_forward.1} parent=11 // pred_fallthru
          _
        // Predicated region
        $region41: #{mlp_forward.1} parent=11 // pred_check
          %p274 = pneg %p212
        $region42: #{mlp_forward.1} parent=11 // pred_check_branch
          %276 = sbr.rel (%p274) target = $region44
        $region43: #{mlp_forward.1} parent=11 // pred_region
          _
        $region44: #{mlp_forward.1} parent=11 // pred_fallthru
          _
      $region12: #{mlp_forward.1} parent=5 // pred_fallthru
        _
      %p277 = scmp.lt.s32.totalorder %s18, 2
      // Predicated region
      $region45: #{mlp_forward.1} parent=5 // pred_check
        %p278 = pneg %p277
      $region46: #{mlp_forward.1} parent=5 // pred_check_branch
        %280 = sbr.rel (%p278) target = $region48
      $region47: #{mlp_forward.1} parent=5 // pred_region
        // Predicated region
        $region49: #{mlp_forward.1} parent=47 // pred_check
          %p281 = pneg %p38
        $region50: #{mlp_forward.1} parent=47 // pred_check_branch
          %283 = sbr.rel (%p281) target = $region52
        $region51: #{mlp_forward.1} parent=47 // pred_region
          %p284 = scmp.lt.s32.totalorder %s18, 1
          %s285 = scalar_select %p284, %s18, 1
          %s286 = smul.addr %s285, 8
          %s287 = scalar_lea.vmem %s0, %s286
        $region52: #{mlp_forward.1} parent=47 // pred_fallthru
          _
      $region48: #{mlp_forward.1} parent=5 // pred_fallthru
        _
      %p288 = scmp.le.s32.totalorder 1, %s18
      %p289 = scmp.lt.s32.totalorder %s18, 3
      %p290 = pnand %p288, %p289
      %p291 = pneg %p290
      // Predicated region
      $region53: #{mlp_forward.1} parent=5 // pred_check
        _
      $region54: #{mlp_forward.1} parent=5 // pred_check_branch
        %293 = sbr.rel (%p290) target = $region56
      $region55: #{mlp_forward.1} parent=5 // pred_region
        %s294 = ssub.s32 %s18, 1
        %p295 = scmp.lt.s32.totalorder %s23, 1
        %s296 = scalar_select %p295, %s23, 1
        %s297 = smul.addr %s296, 8
        %s298 = scalar_lea.vmem %s0, %s297
        %p299 = pneg %p44
        %p300 = pneg %p41
        %p301 = pneg %p65
        %p302 = pneg %p62
        %p303 = pneg %p86
        %p304 = pneg %p83
        %p305 = pneg %p107
        %p306 = pneg %p104
        %p307 = pneg %p128
        %p308 = pneg %p125
        %p309 = pneg %p149
        %p310 = pneg %p146
        %p311 = pneg %p170
        %p312 = pneg %p167
        %p313 = pneg %p191
        %p314 = pneg %p188
        %p315 = pneg %p212
        %p316 = pneg %p209
        %p317 = pneg %p238
        %p318 = pneg %p235
        %s319 = sand.u32 %s225, 1
        %s320 = scalar_lea.sflag [#allocation3], %s319
        %s321 = sand.u32 %s225, 1
        %s322 = smul.addr %s321, 56
        %s323 = scalar_lea.vmem [#allocation2], %s322
        %p324 = scmp.lt.s32.totalorder %s23, 1
        %s325 = scalar_select %p324, %s23, 1
        %s326 = smul.addr %s325, 8
        %s327 = scalar_lea.vmem %s0, %s326
        %v328 = vld [vmem:[%s327] sm:$0xff]
        %v329 = vld [vmem:[%s1] sm:$0xff]
        %331 = vset.pattern.permute.xlu0 0
        %332 = vperm.xlu0 %331, %v328
        %v333 = vpop.permute.xlu0 %332
        %v336 = vperm.slane %v329, 0
        %v337 = vperm.slane %v329, 2
        %v338 = vperm.slane %v329, 4
        %v339 = vperm.slane %v329, 6
        %v344 = vperm.slane %v336, 0
        %v345 = vperm.slane %v337, 0
        %v346 = vperm.slane %v338, 0
        %v347 = vperm.slane %v339, 0
        %v348 = vmul.f32 %v333, %v344
        %v349 = vmul.f32 %v333, %v345
        %v350 = vmul.f32 %v333, %v346
        %v351 = vmul.f32 %v333, %v347
        %352 = vset.pattern.permute.xlu0 1
        %353 = vperm.xlu0 %352, %v328
        %v354 = vpop.permute.xlu0 %353
        %v356 = vperm.slane %v329, 1
        %v357 = vperm.slane %v329, 3
        %v358 = vperm.slane %v329, 5
        %v359 = vperm.slane %v329, 7
        %v364 = vperm.slane %v356, 1
        %v365 = vperm.slane %v357, 1
        %v366 = vperm.slane %v358, 1
        %v367 = vperm.slane %v359, 1
        %v368 = vmul.f32 %v354, %v364
        %v369 = vmul.f32 %v354, %v365
        %v370 = vmul.f32 %v354, %v366
        %v371 = vmul.f32 %v354, %v367
        %v372 = vadd.f32 %v348, %v368
        %v373 = vadd.f32 %v349, %v369
        %v374 = vadd.f32 %v350, %v370
        %v375 = vadd.f32 %v351, %v371
        %v376 = vld [vmem:[%s2] sm:$0xf]
        %v378 = vperm.slane %v376, 0
        %v379 = vperm.slane %v376, 1
        %v380 = vperm.slane %v376, 2
        %v381 = vperm.slane %v376, 3
        %v386 = vadd.f32 %v372, %v378
        %v387 = vadd.f32 %v373, %v379
        %v388 = vadd.f32 %v374, %v380
        %v389 = vadd.f32 %v375, %v381
        %v390 = vmax.f32 %v386, 0.0
        %v391 = vmax.f32 %v387, 0.0
        %v392 = vmax.f32 %v388, 0.0
        %v393 = vmax.f32 %v389, 0.0
        %v394 = vld [vmem:[%s3] sm:$0xff]
        %v395 = vld [vmem:[%s3 + $0x8] sm:$0xff]
        %v396 = vld [vmem:[%s3 + $0x10] sm:$0xff]
        %v397 = vld [vmem:[%s3 + $0x18] sm:$0xff]
        %v398 = vld [vmem:[%s3 + $0x20] sm:$0xff]
        %v399 = vld [vmem:[%s3 + $0x28] sm:$0xff]
        %v400 = vld [vmem:[%s3 + $0x30] sm:$0xff]
        %v401 = vld [vmem:[%s3 + $0x38] sm:$0xff]
        %v402 = vld [vmem:[%s3 + $0x40] sm:$0xff]
        %v403 = vld [vmem:[%s3 + $0x48] sm:$0xff]
        %v404 = vld [vmem:[%s3 + $0x50] sm:$0xff]
        %v405 = vld [vmem:[%s3 + $0x58] sm:$0xff]
        %v406 = vld [vmem:[%s3 + $0x60] sm:$0xff]
        %v407 = vld [vmem:[%s3 + $0x68] sm:$0xff]
        %v408 = vld [vmem:[%s3 + $0x70] sm:$0xff]
        %v409 = vld [vmem:[%s3 + $0x78] sm:$0xff]
        %v410 = vld [vmem:[%s3 + $0x80] sm:$0xff]
        %v411 = vld [vmem:[%s3 + $0x88] sm:$0xff]
        %v412 = vld [vmem:[%s3 + $0x90] sm:$0xff]
        %v413 = vld [vmem:[%s3 + $0x98] sm:$0xff]
        %v414 = vld [vmem:[%s3 + $0xa0] sm:$0xff]
        %v415 = vld [vmem:[%s3 + $0xa8] sm:$0xff]
        %v416 = vld [vmem:[%s3 + $0xb0] sm:$0xff]
        %v417 = vld [vmem:[%s3 + $0xb8] sm:$0xff]
        %v418 = vld [vmem:[%s3 + $0xc0] sm:$0xff]
        %v419 = vld [vmem:[%s3 + $0xc8] sm:$0xff]
        %v420 = vld [vmem:[%s3 + $0xd0] sm:$0xff]
        %v421 = vld [vmem:[%s3 + $0xd8] sm:$0xff]
        %v422 = vld [vmem:[%s3 + $0xe0] sm:$0xff]
        %v423 = vld [vmem:[%s3 + $0xe8] sm:$0xff]
        %v424 = vld [vmem:[%s3 + $0xf0] sm:$0xff]
        %v425 = vld [vmem:[%s3 + $0xf8] sm:$0xff]
        %v426 = vld [vmem:[%s3 + $0x100] sm:$0xff]
        %v427 = vld [vmem:[%s3 + $0x108] sm:$0xff]
        %v428 = vld [vmem:[%s3 + $0x110] sm:$0xff]
        %v429 = vld [vmem:[%s3 + $0x118] sm:$0xff]
        %v430 = vld [vmem:[%s3 + $0x120] sm:$0xff]
        %v431 = vld [vmem:[%s3 + $0x128] sm:$0xff]
        %v432 = vld [vmem:[%s3 + $0x130] sm:$0xff]
        %v433 = vld [vmem:[%s3 + $0x138] sm:$0xff]
        %v434 = vld [vmem:[%s3 + $0x140] sm:$0xff]
        %v435 = vld [vmem:[%s3 + $0x148] sm:$0xff]
        %v436 = vld [vmem:[%s3 + $0x150] sm:$0xff]
        %v437 = vld [vmem:[%s3 + $0x158] sm:$0xff]
        %v438 = vld [vmem:[%s3 + $0x160] sm:$0xff]
        %v439 = vld [vmem:[%s3 + $0x168] sm:$0xff]
        %v440 = vld [vmem:[%s3 + $0x170] sm:$0xff]
        %v441 = vld [vmem:[%s3 + $0x178] sm:$0xff]
        %v442 = vld [vmem:[%s3 + $0x180] sm:$0xff]
        %v443 = vld [vmem:[%s3 + $0x188] sm:$0xff]
        %v444 = vld [vmem:[%s3 + $0x190] sm:$0xff]
        %v445 = vld [vmem:[%s3 + $0x198] sm:$0xff]
        %v446 = vld [vmem:[%s3 + $0x1a0] sm:$0xff]
        %v447 = vld [vmem:[%s3 + $0x1a8] sm:$0xff]
        %v448 = vld [vmem:[%s3 + $0x1b0] sm:$0xff]
        %v449 = vld [vmem:[%s3 + $0x1b8] sm:$0xff]
        %v450 = vld [vmem:[%s3 + $0x1c0] sm:$0xff]
        %v451 = vld [vmem:[%s3 + $0x1c8] sm:$0xff]
        %v452 = vld [vmem:[%s3 + $0x1d0] sm:$0xff]
        %v453 = vld [vmem:[%s3 + $0x1d8] sm:$0xff]
        %v454 = vld [vmem:[%s3 + $0x1e0] sm:$0xff]
        %v455 = vld [vmem:[%s3 + $0x1e8] sm:$0xff]
        %v456 = vld [vmem:[%s3 + $0x1f0] sm:$0xff]
        %v457 = vld [vmem:[%s3 + $0x1f8] sm:$0xff]
        %v458 = vld [vmem:[%s3 + $0x200] sm:$0xff]
        %v459 = vld [vmem:[%s3 + $0x208] sm:$0xff]
        %v460 = vld [vmem:[%s3 + $0x210] sm:$0xff]
        %v461 = vld [vmem:[%s3 + $0x218] sm:$0xff]
        %v462 = vld [vmem:[%s3 + $0x220] sm:$0xff]
        %v463 = vld [vmem:[%s3 + $0x228] sm:$0xff]
        %v464 = vld [vmem:[%s3 + $0x230] sm:$0xff]
        %v465 = vld [vmem:[%s3 + $0x238] sm:$0xff]
        %v466 = vld [vmem:[%s3 + $0x240] sm:$0xff]
        %v467 = vld [vmem:[%s3 + $0x248] sm:$0xff]
        %v468 = vld [vmem:[%s3 + $0x250] sm:$0xff]
        %v469 = vld [vmem:[%s3 + $0x258] sm:$0xff]
        %v470 = vld [vmem:[%s3 + $0x260] sm:$0xff]
        %v471 = vld [vmem:[%s3 + $0x268] sm:$0xff]
        %v472 = vld [vmem:[%s3 + $0x270] sm:$0xff]
        %v473 = vld [vmem:[%s3 + $0x278] sm:$0xff]
        %v474 = vld [vmem:[%s3 + $0x280] sm:$0xff]
        %v475 = vld [vmem:[%s3 + $0x288] sm:$0xff]
        %v476 = vld [vmem:[%s3 + $0x290] sm:$0xff]
        %v477 = vld [vmem:[%s3 + $0x298] sm:$0xff]
        %v478 = vld [vmem:[%s3 + $0x2a0] sm:$0xff]
        %v479 = vld [vmem:[%s3 + $0x2a8] sm:$0xff]
        %v480 = vld [vmem:[%s3 + $0x2b0] sm:$0xff]
        %v481 = vld [vmem:[%s3 + $0x2b8] sm:$0xff]
        %v482 = vld [vmem:[%s3 + $0x2c0] sm:$0xff]
        %v483 = vld [vmem:[%s3 + $0x2c8] sm:$0xff]
        %v484 = vld [vmem:[%s3 + $0x2d0] sm:$0xff]
        %v485 = vld [vmem:[%s3 + $0x2d8] sm:$0xff]
        %v486 = vld [vmem:[%s3 + $0x2e0] sm:$0xff]
        %v487 = vld [vmem:[%s3 + $0x2e8] sm:$0xff]
        %v488 = vld [vmem:[%s3 + $0x2f0] sm:$0xff]
        %v489 = vld [vmem:[%s3 + $0x2f8] sm:$0xff]
        %v490 = vld [vmem:[%s3 + $0x300] sm:$0xff]
        %v491 = vld [vmem:[%s3 + $0x308] sm:$0xff]
        %v492 = vld [vmem:[%s3 + $0x310] sm:$0xff]
        %v493 = vld [vmem:[%s3 + $0x318] sm:$0xff]
        %v494 = vld [vmem:[%s3 + $0x320] sm:$0xff]
        %v495 = vld [vmem:[%s3 + $0x328] sm:$0xff]
        %v496 = vld [vmem:[%s3 + $0x330] sm:$0xff]
        %v497 = vld [vmem:[%s3 + $0x338] sm:$0xff]
        %v498 = vld [vmem:[%s3 + $0x340] sm:$0xff]
        %v499 = vld [vmem:[%s3 + $0x348] sm:$0xff]
        %v500 = vld [vmem:[%s3 + $0x350] sm:$0xff]
        %v501 = vld [vmem:[%s3 + $0x358] sm:$0xff]
        %v502 = vld [vmem:[%s3 + $0x360] sm:$0xff]
        %v503 = vld [vmem:[%s3 + $0x368] sm:$0xff]
        %v504 = vld [vmem:[%s3 + $0x370] sm:$0xff]
        %v505 = vld [vmem:[%s3 + $0x378] sm:$0xff]
        %v506 = vld [vmem:[%s3 + $0x380] sm:$0xff]
        %v507 = vld [vmem:[%s3 + $0x388] sm:$0xff]
        %v508 = vld [vmem:[%s3 + $0x390] sm:$0xff]
        %v509 = vld [vmem:[%s3 + $0x398] sm:$0xff]
        %v510 = vld [vmem:[%s3 + $0x3a0] sm:$0xff]
        %v511 = vld [vmem:[%s3 + $0x3a8] sm:$0xff]
        %v512 = vld [vmem:[%s3 + $0x3b0] sm:$0xff]
        %v513 = vld [vmem:[%s3 + $0x3b8] sm:$0xff]
        %v514 = vld [vmem:[%s3 + $0x3c0] sm:$0xff]
        %v515 = vld [vmem:[%s3 + $0x3c8] sm:$0xff]
        %v516 = vld [vmem:[%s3 + $0x3d0] sm:$0xff]
        %v517 = vld [vmem:[%s3 + $0x3d8] sm:$0xff]
        %v518 = vld [vmem:[%s3 + $0x3e0] sm:$0xff]
        %v519 = vld [vmem:[%s3 + $0x3e8] sm:$0xff]
        %v520 = vld [vmem:[%s3 + $0x3f0] sm:$0xff]
        %v521 = vld [vmem:[%s3 + $0x3f8] sm:$0xff]
        %v522 = vld [vmem:[%s3 + $0x400] sm:$0xff]
        %v523 = vld [vmem:[%s3 + $0x408] sm:$0xff]
        %v524 = vld [vmem:[%s3 + $0x410] sm:$0xff]
        %v525 = vld [vmem:[%s3 + $0x418] sm:$0xff]
        %v526 = vld [vmem:[%s3 + $0x420] sm:$0xff]
        %v527 = vld [vmem:[%s3 + $0x428] sm:$0xff]
        %v528 = vld [vmem:[%s3 + $0x430] sm:$0xff]
        %v529 = vld [vmem:[%s3 + $0x438] sm:$0xff]
        %v530 = vld [vmem:[%s3 + $0x440] sm:$0xff]
        %v531 = vld [vmem:[%s3 + $0x448] sm:$0xff]
        %v532 = vld [vmem:[%s3 + $0x450] sm:$0xff]
        %v533 = vld [vmem:[%s3 + $0x458] sm:$0xff]
        %v534 = vld [vmem:[%s3 + $0x460] sm:$0xff]
        %v535 = vld [vmem:[%s3 + $0x468] sm:$0xff]
        %v536 = vld [vmem:[%s3 + $0x470] sm:$0xff]
        %v537 = vld [vmem:[%s3 + $0x478] sm:$0xff]
        %v538 = vld [vmem:[%s3 + $0x480] sm:$0xff]
        %v539 = vld [vmem:[%s3 + $0x488] sm:$0xff]
        %v540 = vld [vmem:[%s3 + $0x490] sm:$0xff]
        %v541 = vld [vmem:[%s3 + $0x498] sm:$0xff]
        %v542 = vld [vmem:[%s3 + $0x4a0] sm:$0xff]
        %v543 = vld [vmem:[%s3 + $0x4a8] sm:$0xff]
        %v544 = vld [vmem:[%s3 + $0x4b0] sm:$0xff]
        %v545 = vld [vmem:[%s3 + $0x4b8] sm:$0xff]
        %v546 = vld [vmem:[%s3 + $0x4c0] sm:$0xff]
        %v547 = vld [vmem:[%s3 + $0x4c8] sm:$0xff]
        %v548 = vld [vmem:[%s3 + $0x4d0] sm:$0xff]
        %v549 = vld [vmem:[%s3 + $0x4d8] sm:$0xff]
        %v550 = vld [vmem:[%s3 + $0x4e0] sm:$0xff]
        %v551 = vld [vmem:[%s3 + $0x4e8] sm:$0xff]
        %v552 = vld [vmem:[%s3 + $0x4f0] sm:$0xff]
        %v553 = vld [vmem:[%s3 + $0x4f8] sm:$0xff]
        %v554 = vld [vmem:[%s3 + $0x500] sm:$0xff]
        %v555 = vld [vmem:[%s3 + $0x508] sm:$0xff]
        %v556 = vld [vmem:[%s3 + $0x510] sm:$0xff]
        %v557 = vld [vmem:[%s3 + $0x518] sm:$0xff]
        %v558 = vld [vmem:[%s3 + $0x520] sm:$0xff]
        %v559 = vld [vmem:[%s3 + $0x528] sm:$0xff]
        %v560 = vld [vmem:[%s3 + $0x530] sm:$0xff]
        %v561 = vld [vmem:[%s3 + $0x538] sm:$0xff]
        %v562 = vld [vmem:[%s3 + $0x540] sm:$0xff]
        %v563 = vld [vmem:[%s3 + $0x548] sm:$0xff]
        %v564 = vld [vmem:[%s3 + $0x550] sm:$0xff]
        %v565 = vld [vmem:[%s3 + $0x558] sm:$0xff]
        %v566 = vld [vmem:[%s3 + $0x560] sm:$0xff]
        %v567 = vld [vmem:[%s3 + $0x568] sm:$0xff]
        %v568 = vld [vmem:[%s3 + $0x570] sm:$0xff]
        %v569 = vld [vmem:[%s3 + $0x578] sm:$0xff]
        %v570 = vld [vmem:[%s3 + $0x580] sm:$0xff]
        %v571 = vld [vmem:[%s3 + $0x588] sm:$0xff]
        %v572 = vld [vmem:[%s3 + $0x590] sm:$0xff]
        %v573 = vld [vmem:[%s3 + $0x598] sm:$0xff]
        %v574 = vld [vmem:[%s3 + $0x5a0] sm:$0xff]
        %v575 = vld [vmem:[%s3 + $0x5a8] sm:$0xff]
        %v576 = vld [vmem:[%s3 + $0x5b0] sm:$0xff]
        %v577 = vld [vmem:[%s3 + $0x5b8] sm:$0xff]
        %v578 = vld [vmem:[%s3 + $0x5c0] sm:$0xff]
        %v579 = vld [vmem:[%s3 + $0x5c8] sm:$0xff]
        %v580 = vld [vmem:[%s3 + $0x5d0] sm:$0xff]
        %v581 = vld [vmem:[%s3 + $0x5d8] sm:$0xff]
        %v582 = vld [vmem:[%s3 + $0x5e0] sm:$0xff]
        %v583 = vld [vmem:[%s3 + $0x5e8] sm:$0xff]
        %v584 = vld [vmem:[%s3 + $0x5f0] sm:$0xff]
        %v585 = vld [vmem:[%s3 + $0x5f8] sm:$0xff]
        %v586 = vld [vmem:[%s3 + $0x600] sm:$0xff]
        %v587 = vld [vmem:[%s3 + $0x608] sm:$0xff]
        %v588 = vld [vmem:[%s3 + $0x610] sm:$0xff]
        %v589 = vld [vmem:[%s3 + $0x618] sm:$0xff]
        %v590 = vld [vmem:[%s3 + $0x620] sm:$0xff]
        %v591 = vld [vmem:[%s3 + $0x628] sm:$0xff]
        %v592 = vld [vmem:[%s3 + $0x630] sm:$0xff]
        %v593 = vld [vmem:[%s3 + $0x638] sm:$0xff]
        %v594 = vld [vmem:[%s3 + $0x640] sm:$0xff]
        %v595 = vld [vmem:[%s3 + $0x648] sm:$0xff]
        %v596 = vld [vmem:[%s3 + $0x650] sm:$0xff]
        %v597 = vld [vmem:[%s3 + $0x658] sm:$0xff]
        %v598 = vld [vmem:[%s3 + $0x660] sm:$0xff]
        %v599 = vld [vmem:[%s3 + $0x668] sm:$0xff]
        %v600 = vld [vmem:[%s3 + $0x670] sm:$0xff]
        %v601 = vld [vmem:[%s3 + $0x678] sm:$0xff]
        %v602 = vld [vmem:[%s3 + $0x680] sm:$0xff]
        %v603 = vld [vmem:[%s3 + $0x688] sm:$0xff]
        %v604 = vld [vmem:[%s3 + $0x690] sm:$0xff]
        %v605 = vld [vmem:[%s3 + $0x698] sm:$0xff]
        %v606 = vld [vmem:[%s3 + $0x6a0] sm:$0xff]
        %v607 = vld [vmem:[%s3 + $0x6a8] sm:$0xff]
        %v608 = vld [vmem:[%s3 + $0x6b0] sm:$0xff]
        %v609 = vld [vmem:[%s3 + $0x6b8] sm:$0xff]
        %v610 = vld [vmem:[%s3 + $0x6c0] sm:$0xff]
        %v611 = vld [vmem:[%s3 + $0x6c8] sm:$0xff]
        %v612 = vld [vmem:[%s3 + $0x6d0] sm:$0xff]
        %v613 = vld [vmem:[%s3 + $0x6d8] sm:$0xff]
        %v614 = vld [vmem:[%s3 + $0x6e0] sm:$0xff]
        %v615 = vld [vmem:[%s3 + $0x6e8] sm:$0xff]
        %v616 = vld [vmem:[%s3 + $0x6f0] sm:$0xff]
        %v617 = vld [vmem:[%s3 + $0x6f8] sm:$0xff]
        %v618 = vld [vmem:[%s3 + $0x700] sm:$0xff]
        %v619 = vld [vmem:[%s3 + $0x708] sm:$0xff]
        %v620 = vld [vmem:[%s3 + $0x710] sm:$0xff]
        %v621 = vld [vmem:[%s3 + $0x718] sm:$0xff]
        %v622 = vld [vmem:[%s3 + $0x720] sm:$0xff]
        %v623 = vld [vmem:[%s3 + $0x728] sm:$0xff]
        %v624 = vld [vmem:[%s3 + $0x730] sm:$0xff]
        %v625 = vld [vmem:[%s3 + $0x738] sm:$0xff]
        %v626 = vld [vmem:[%s3 + $0x740] sm:$0xff]
        %v627 = vld [vmem:[%s3 + $0x748] sm:$0xff]
        %v628 = vld [vmem:[%s3 + $0x750] sm:$0xff]
        %v629 = vld [vmem:[%s3 + $0x758] sm:$0xff]
        %v630 = vld [vmem:[%s3 + $0x760] sm:$0xff]
        %v631 = vld [vmem:[%s3 + $0x768] sm:$0xff]
        %v632 = vld [vmem:[%s3 + $0x770] sm:$0xff]
        %v633 = vld [vmem:[%s3 + $0x778] sm:$0xff]
        %v634 = vld [vmem:[%s3 + $0x780] sm:$0xff]
        %v635 = vld [vmem:[%s3 + $0x788] sm:$0xff]
        %v636 = vld [vmem:[%s3 + $0x790] sm:$0xff]
        %v637 = vld [vmem:[%s3 + $0x798] sm:$0xff]
        %v638 = vld [vmem:[%s3 + $0x7a0] sm:$0xff]
        %v639 = vld [vmem:[%s3 + $0x7a8] sm:$0xff]
        %v640 = vld [vmem:[%s3 + $0x7b0] sm:$0xff]
        %v641 = vld [vmem:[%s3 + $0x7b8] sm:$0xff]
        %v642 = vld [vmem:[%s3 + $0x7c0] sm:$0xff]
        %v643 = vld [vmem:[%s3 + $0x7c8] sm:$0xff]
        %v644 = vld [vmem:[%s3 + $0x7d0] sm:$0xff]
        %v645 = vld [vmem:[%s3 + $0x7d8] sm:$0xff]
        %v646 = vld [vmem:[%s3 + $0x7e0] sm:$0xff]
        %v647 = vld [vmem:[%s3 + $0x7e8] sm:$0xff]
        %v648 = vld [vmem:[%s3 + $0x7f0] sm:$0xff]
        %v649 = vld [vmem:[%s3 + $0x7f8] sm:$0xff]
        %v650 = vld [vmem:[%s4] sm:$0xf]
        %v652 = vperm.slane %v650, 0
        %v653 = vperm.slane %v650, 1
        %v654 = vperm.slane %v650, 2
        %v655 = vperm.slane %v650, 3
        %660 = vmatpush.msra.mxu0 %v454
        %661 = vmatpush.msra.mxu0 %v450
        %662 = vmatpush.msra.mxu0 %v446
        %663 = vmatpush.msra.mxu0 %v442
        %664 = vmatpush.msra.mxu0 %v438
        %665 = vmatpush.msra.mxu0 %v434
        %666 = vmatpush.msra.mxu0 %v430
        %667 = vmatpush.msra.mxu0 %v426
        %668 = vmatpush.msra.mxu0 %v422
        %669 = vmatpush.msra.mxu0 %v418
        %670 = vmatpush.msra.mxu0 %v414
        %671 = vmatpush.msra.mxu0 %v410
        %672 = vmatpush.msra.mxu0 %v406
        %673 = vmatpush.msra.mxu0 %v402
        %674 = vmatpush.msra.mxu0 %v398
        %675 = vmatpush.msra.mxu0 %v394
        %676 = vmatmul.f32.gmra.mxu0 %v390
        %v677 = vpop.f32.mrf.mxu0
        %v678 = vadd.f32 %v652, %v677
        %679 = vdwg.mxu0
        %680 = vmatpush.msra.mxu0 %v518
        %681 = vmatpush.msra.mxu0 %v514
        %682 = vmatpush.msra.mxu0 %v510
        %683 = vmatpush.msra.mxu0 %v506
        %684 = vmatpush.msra.mxu0 %v502
        %685 = vmatpush.msra.mxu0 %v498
        %686 = vmatpush.msra.mxu0 %v494
        %687 = vmatpush.msra.mxu0 %v490
        %688 = vmatpush.msra.mxu0 %v486
        %689 = vmatpush.msra.mxu0 %v482
        %690 = vmatpush.msra.mxu0 %v478
        %691 = vmatpush.msra.mxu0 %v474
        %692 = vmatpush.msra.mxu0 %v470
        %693 = vmatpush.msra.mxu0 %v466
        %694 = vmatpush.msra.mxu0 %v462
        %695 = vmatpush.msra.mxu0 %v458
        %696 = vmatmul.f32.gmra.mxu0 %v391
        %v697 = vpop.f32.mrf.mxu0
        %v698 = vadd.f32 %v678, %v697
        %699 = vdwg.mxu0
        %700 = vmatpush.msra.mxu0 %v582
        %701 = vmatpush.msra.mxu0 %v578
        %702 = vmatpush.msra.mxu0 %v574
        %703 = vmatpush.msra.mxu0 %v570
        %704 = vmatpush.msra.mxu0 %v566
        %705 = vmatpush.msra.mxu0 %v562
        %706 = vmatpush.msra.mxu0 %v558
        %707 = vmatpush.msra.mxu0 %v554
        %708 = vmatpush.msra.mxu0 %v550
        %709 = vmatpush.msra.mxu0 %v546
        %710 = vmatpush.msra.mxu0 %v542
        %711 = vmatpush.msra.mxu0 %v538
        %712 = vmatpush.msra.mxu0 %v534
        %713 = vmatpush.msra.mxu0 %v530
        %714 = vmatpush.msra.mxu0 %v526
        %715 = vmatpush.msra.mxu0 %v522
        %716 = vmatmul.f32.gmra.mxu0 %v392
        %v717 = vpop.f32.mrf.mxu0
        %v718 = vadd.f32 %v698, %v717
        %719 = vdwg.mxu0
        %720 = vmatpush.msra.mxu0 %v646
        %721 = vmatpush.msra.mxu0 %v642
        %722 = vmatpush.msra.mxu0 %v638
        %723 = vmatpush.msra.mxu0 %v634
        %724 = vmatpush.msra.mxu0 %v630
        %725 = vmatpush.msra.mxu0 %v626
        %726 = vmatpush.msra.mxu0 %v622
        %727 = vmatpush.msra.mxu0 %v618
        %728 = vmatpush.msra.mxu0 %v614
        %729 = vmatpush.msra.mxu0 %v610
        %730 = vmatpush.msra.mxu0 %v606
        %731 = vmatpush.msra.mxu0 %v602
        %732 = vmatpush.msra.mxu0 %v598
        %733 = vmatpush.msra.mxu0 %v594
        %734 = vmatpush.msra.mxu0 %v590
        %735 = vmatpush.msra.mxu0 %v586
        %736 = vmatmul.f32.gmra.mxu0 %v393
        %v737 = vpop.f32.mrf.mxu0
        %v738 = vadd.f32 %v718, %v737
        %739 = vdwg.mxu0
        %740 = vmatpush.msra.mxu0 %v455
        %741 = vmatpush.msra.mxu0 %v451
        %742 = vmatpush.msra.mxu0 %v447
        %743 = vmatpush.msra.mxu0 %v443
        %744 = vmatpush.msra.mxu0 %v439
        %745 = vmatpush.msra.mxu0 %v435
        %746 = vmatpush.msra.mxu0 %v431
        %747 = vmatpush.msra.mxu0 %v427
        %748 = vmatpush.msra.mxu0 %v423
        %749 = vmatpush.msra.mxu0 %v419
        %750 = vmatpush.msra.mxu0 %v415
        %751 = vmatpush.msra.mxu0 %v411
        %752 = vmatpush.msra.mxu0 %v407
        %753 = vmatpush.msra.mxu0 %v403
        %754 = vmatpush.msra.mxu0 %v399
        %755 = vmatpush.msra.mxu0 %v395
        %756 = vmatmul.f32.gmra.mxu0 %v390
        %v757 = vpop.f32.mrf.mxu0
        %v758 = vadd.f32 %v653, %v757
        %759 = vdwg.mxu0
        %760 = vmatpush.msra.mxu0 %v519
        %761 = vmatpush.msra.mxu0 %v515
        %762 = vmatpush.msra.mxu0 %v511
        %763 = vmatpush.msra.mxu0 %v507
        %764 = vmatpush.msra.mxu0 %v503
        %765 = vmatpush.msra.mxu0 %v499
        %766 = vmatpush.msra.mxu0 %v495
        %767 = vmatpush.msra.mxu0 %v491
        %768 = vmatpush.msra.mxu0 %v487
        %769 = vmatpush.msra.mxu0 %v483
        %770 = vmatpush.msra.mxu0 %v479
        %771 = vmatpush.msra.mxu0 %v475
        %772 = vmatpush.msra.mxu0 %v471
        %773 = vmatpush.msra.mxu0 %v467
        %774 = vmatpush.msra.mxu0 %v463
        %775 = vmatpush.msra.mxu0 %v459
        %776 = vmatmul.f32.gmra.mxu0 %v391
        %v777 = vpop.f32.mrf.mxu0
        %v778 = vadd.f32 %v758, %v777
        %779 = vdwg.mxu0
        %780 = vmatpush.msra.mxu0 %v583
        %781 = vmatpush.msra.mxu0 %v579
        %782 = vmatpush.msra.mxu0 %v575
        %783 = vmatpush.msra.mxu0 %v571
        %784 = vmatpush.msra.mxu0 %v567
        %785 = vmatpush.msra.mxu0 %v563
        %786 = vmatpush.msra.mxu0 %v559
        %787 = vmatpush.msra.mxu0 %v555
        %788 = vmatpush.msra.mxu0 %v551
        %789 = vmatpush.msra.mxu0 %v547
        %790 = vmatpush.msra.mxu0 %v543
        %791 = vmatpush.msra.mxu0 %v539
        %792 = vmatpush.msra.mxu0 %v535
        %793 = vmatpush.msra.mxu0 %v531
        %794 = vmatpush.msra.mxu0 %v527
        %795 = vmatpush.msra.mxu0 %v523
        %796 = vmatmul.f32.gmra.mxu0 %v392
        %v797 = vpop.f32.mrf.mxu0
        %v798 = vadd.f32 %v778, %v797
        %799 = vdwg.mxu0
        %800 = vmatpush.msra.mxu0 %v647
        %801 = vmatpush.msra.mxu0 %v643
        %802 = vmatpush.msra.mxu0 %v639
        %803 = vmatpush.msra.mxu0 %v635
        %804 = vmatpush.msra.mxu0 %v631
        %805 = vmatpush.msra.mxu0 %v627
        %806 = vmatpush.msra.mxu0 %v623
        %807 = vmatpush.msra.mxu0 %v619
        %808 = vmatpush.msra.mxu0 %v615
        %809 = vmatpush.msra.mxu0 %v611
        %810 = vmatpush.msra.mxu0 %v607
        %811 = vmatpush.msra.mxu0 %v603
        %812 = vmatpush.msra.mxu0 %v599
        %813 = vmatpush.msra.mxu0 %v595
        %814 = vmatpush.msra.mxu0 %v591
        %815 = vmatpush.msra.mxu0 %v587
        %816 = vmatmul.f32.gmra.mxu0 %v393
        %v817 = vpop.f32.mrf.mxu0
        %v818 = vadd.f32 %v798, %v817
        %819 = vdwg.mxu0
        %820 = vmatpush.msra.mxu0 %v456
        %821 = vmatpush.msra.mxu0 %v452
        %822 = vmatpush.msra.mxu0 %v448
        %823 = vmatpush.msra.mxu0 %v444
        %824 = vmatpush.msra.mxu0 %v440
        %825 = vmatpush.msra.mxu0 %v436
        %826 = vmatpush.msra.mxu0 %v432
        %827 = vmatpush.msra.mxu0 %v428
        %828 = vmatpush.msra.mxu0 %v424
        %829 = vmatpush.msra.mxu0 %v420
        %830 = vmatpush.msra.mxu0 %v416
        %831 = vmatpush.msra.mxu0 %v412
        %832 = vmatpush.msra.mxu0 %v408
        %833 = vmatpush.msra.mxu0 %v404
        %834 = vmatpush.msra.mxu0 %v400
        %835 = vmatpush.msra.mxu0 %v396
        %836 = vmatmul.f32.gmra.mxu0 %v390
        %v837 = vpop.f32.mrf.mxu0
        %v838 = vadd.f32 %v654, %v837
        %839 = vdwg.mxu0
        %840 = vmatpush.msra.mxu0 %v520
        %841 = vmatpush.msra.mxu0 %v516
        %842 = vmatpush.msra.mxu0 %v512
        %843 = vmatpush.msra.mxu0 %v508
        %844 = vmatpush.msra.mxu0 %v504
        %845 = vmatpush.msra.mxu0 %v500
        %846 = vmatpush.msra.mxu0 %v496
        %847 = vmatpush.msra.mxu0 %v492
        %848 = vmatpush.msra.mxu0 %v488
        %849 = vmatpush.msra.mxu0 %v484
        %850 = vmatpush.msra.mxu0 %v480
        %851 = vmatpush.msra.mxu0 %v476
        %852 = vmatpush.msra.mxu0 %v472
        %853 = vmatpush.msra.mxu0 %v468
        %854 = vmatpush.msra.mxu0 %v464
        %855 = vmatpush.msra.mxu0 %v460
        %856 = vmatmul.f32.gmra.mxu0 %v391
        %v857 = vpop.f32.mrf.mxu0
        %v858 = vadd.f32 %v838, %v857
        %859 = vdwg.mxu0
        %860 = vmatpush.msra.mxu0 %v584
        %861 = vmatpush.msra.mxu0 %v580
        %862 = vmatpush.msra.mxu0 %v576
        %863 = vmatpush.msra.mxu0 %v572
        %864 = vmatpush.msra.mxu0 %v568
        %865 = vmatpush.msra.mxu0 %v564
        %866 = vmatpush.msra.mxu0 %v560
        %867 = vmatpush.msra.mxu0 %v556
        %868 = vmatpush.msra.mxu0 %v552
        %869 = vmatpush.msra.mxu0 %v548
        %870 = vmatpush.msra.mxu0 %v544
        %871 = vmatpush.msra.mxu0 %v540
        %872 = vmatpush.msra.mxu0 %v536
        %873 = vmatpush.msra.mxu0 %v532
        %874 = vmatpush.msra.mxu0 %v528
        %875 = vmatpush.msra.mxu0 %v524
        %876 = vmatmul.f32.gmra.mxu0 %v392
        %v877 = vpop.f32.mrf.mxu0
        %v878 = vadd.f32 %v858, %v877
        %879 = vdwg.mxu0
        %880 = vmatpush.msra.mxu0 %v648
        %881 = vmatpush.msra.mxu0 %v644
        %882 = vmatpush.msra.mxu0 %v640
        %883 = vmatpush.msra.mxu0 %v636
        %884 = vmatpush.msra.mxu0 %v632
        %885 = vmatpush.msra.mxu0 %v628
        %886 = vmatpush.msra.mxu0 %v624
        %887 = vmatpush.msra.mxu0 %v620
        %888 = vmatpush.msra.mxu0 %v616
        %889 = vmatpush.msra.mxu0 %v612
        %890 = vmatpush.msra.mxu0 %v608
        %891 = vmatpush.msra.mxu0 %v604
        %892 = vmatpush.msra.mxu0 %v600
        %893 = vmatpush.msra.mxu0 %v596
        %894 = vmatpush.msra.mxu0 %v592
        %895 = vmatpush.msra.mxu0 %v588
        %896 = vmatmul.f32.gmra.mxu0 %v393
        %v897 = vpop.f32.mrf.mxu0
        %v898 = vadd.f32 %v878, %v897
        %899 = vdwg.mxu0
        %900 = vmatpush.msra.mxu0 %v457
        %901 = vmatpush.msra.mxu0 %v453
        %902 = vmatpush.msra.mxu0 %v449
        %903 = vmatpush.msra.mxu0 %v445
        %904 = vmatpush.msra.mxu0 %v441
        %905 = vmatpush.msra.mxu0 %v437
        %906 = vmatpush.msra.mxu0 %v433
        %907 = vmatpush.msra.mxu0 %v429
        %908 = vmatpush.msra.mxu0 %v425
        %909 = vmatpush.msra.mxu0 %v421
        %910 = vmatpush.msra.mxu0 %v417
        %911 = vmatpush.msra.mxu0 %v413
        %912 = vmatpush.msra.mxu0 %v409
        %913 = vmatpush.msra.mxu0 %v405
        %914 = vmatpush.msra.mxu0 %v401
        %915 = vmatpush.msra.mxu0 %v397
        %916 = vmatmul.f32.gmra.mxu0 %v390
        %v917 = vpop.f32.mrf.mxu0
        %v918 = vadd.f32 %v655, %v917
        %919 = vdwg.mxu0
        %920 = vmatpush.msra.mxu0 %v521
        %921 = vmatpush.msra.mxu0 %v517
        %922 = vmatpush.msra.mxu0 %v513
        %923 = vmatpush.msra.mxu0 %v509
        %924 = vmatpush.msra.mxu0 %v505
        %925 = vmatpush.msra.mxu0 %v501
        %926 = vmatpush.msra.mxu0 %v497
        %927 = vmatpush.msra.mxu0 %v493
        %928 = vmatpush.msra.mxu0 %v489
        %929 = vmatpush.msra.mxu0 %v485
        %930 = vmatpush.msra.mxu0 %v481
        %931 = vmatpush.msra.mxu0 %v477
        %932 = vmatpush.msra.mxu0 %v473
        %933 = vmatpush.msra.mxu0 %v469
        %934 = vmatpush.msra.mxu0 %v465
        %935 = vmatpush.msra.mxu0 %v461
        %936 = vmatmul.f32.gmra.mxu0 %v391
        %v937 = vpop.f32.mrf.mxu0
        %v938 = vadd.f32 %v918, %v937
        %939 = vdwg.mxu0
        %940 = vmatpush.msra.mxu0 %v585
        %941 = vmatpush.msra.mxu0 %v581
        %942 = vmatpush.msra.mxu0 %v577
        %943 = vmatpush.msra.mxu0 %v573
        %944 = vmatpush.msra.mxu0 %v569
        %945 = vmatpush.msra.mxu0 %v565
        %946 = vmatpush.msra.mxu0 %v561
        %947 = vmatpush.msra.mxu0 %v557
        %948 = vmatpush.msra.mxu0 %v553
        %949 = vmatpush.msra.mxu0 %v549
        %950 = vmatpush.msra.mxu0 %v545
        %951 = vmatpush.msra.mxu0 %v541
        %952 = vmatpush.msra.mxu0 %v537
        %953 = vmatpush.msra.mxu0 %v533
        %954 = vmatpush.msra.mxu0 %v529
        %955 = vmatpush.msra.mxu0 %v525
        %956 = vmatmul.f32.gmra.mxu0 %v392
        %v957 = vpop.f32.mrf.mxu0
        %v958 = vadd.f32 %v938, %v957
        %959 = vdwg.mxu0
        %960 = vmatpush.msra.mxu0 %v649
        %961 = vmatpush.msra.mxu0 %v645
        %962 = vmatpush.msra.mxu0 %v641
        %963 = vmatpush.msra.mxu0 %v637
        %964 = vmatpush.msra.mxu0 %v633
        %965 = vmatpush.msra.mxu0 %v629
        %966 = vmatpush.msra.mxu0 %v625
        %967 = vmatpush.msra.mxu0 %v621
        %968 = vmatpush.msra.mxu0 %v617
        %969 = vmatpush.msra.mxu0 %v613
        %970 = vmatpush.msra.mxu0 %v609
        %971 = vmatpush.msra.mxu0 %v605
        %972 = vmatpush.msra.mxu0 %v601
        %973 = vmatpush.msra.mxu0 %v597
        %974 = vmatpush.msra.mxu0 %v593
        %975 = vmatpush.msra.mxu0 %v589
        %976 = vmatmul.f32.gmra.mxu0 %v393
        %v977 = vpop.f32.mrf.mxu0
        %v978 = vadd.f32 %v958, %v977
        %979 = vdwg.mxu0
        %v980 = vmax.f32 %v738, 0.0
        %v981 = vmax.f32 %v818, 0.0
        %v982 = vmax.f32 %v898, 0.0
        %v983 = vmax.f32 %v978, 0.0
        %v984 = vld [vmem:[%s5] sm:$0xff]
        %v985 = vld [vmem:[%s5 + $0x8] sm:$0xff]
        %v986 = vld [vmem:[%s5 + $0x10] sm:$0xff]
        %v987 = vld [vmem:[%s5 + $0x18] sm:$0xff]
        %v988 = vld [vmem:[%s5 + $0x20] sm:$0xff]
        %v989 = vld [vmem:[%s5 + $0x28] sm:$0xff]
        %v990 = vld [vmem:[%s5 + $0x30] sm:$0xff]
        %v991 = vld [vmem:[%s5 + $0x38] sm:$0xff]
        %v992 = vld [vmem:[%s5 + $0x40] sm:$0xff]
        %v993 = vld [vmem:[%s5 + $0x48] sm:$0xff]
        %v994 = vld [vmem:[%s5 + $0x50] sm:$0xff]
        %v995 = vld [vmem:[%s5 + $0x58] sm:$0xff]
        %v996 = vld [vmem:[%s5 + $0x60] sm:$0xff]
        %v997 = vld [vmem:[%s5 + $0x68] sm:$0xff]
        %v998 = vld [vmem:[%s5 + $0x70] sm:$0xff]
        %v999 = vld [vmem:[%s5 + $0x78] sm:$0xff]
        %v1000 = vld [vmem:[%s5 + $0x80] sm:$0xff]
        %v1001 = vld [vmem:[%s5 + $0x88] sm:$0xff]
        %v1002 = vld [vmem:[%s5 + $0x90] sm:$0xff]
        %v1003 = vld [vmem:[%s5 + $0x98] sm:$0xff]
        %v1004 = vld [vmem:[%s5 + $0xa0] sm:$0xff]
        %v1005 = vld [vmem:[%s5 + $0xa8] sm:$0xff]
        %v1006 = vld [vmem:[%s5 + $0xb0] sm:$0xff]
        %v1007 = vld [vmem:[%s5 + $0xb8] sm:$0xff]
        %v1008 = vld [vmem:[%s5 + $0xc0] sm:$0xff]
        %v1009 = vld [vmem:[%s5 + $0xc8] sm:$0xff]
        %v1010 = vld [vmem:[%s5 + $0xd0] sm:$0xff]
        %v1011 = vld [vmem:[%s5 + $0xd8] sm:$0xff]
        %v1012 = vld [vmem:[%s5 + $0xe0] sm:$0xff]
        %v1013 = vld [vmem:[%s5 + $0xe8] sm:$0xff]
        %v1014 = vld [vmem:[%s5 + $0xf0] sm:$0xff]
        %v1015 = vld [vmem:[%s5 + $0xf8] sm:$0xff]
        %v1016 = vld [vmem:[%s5 + $0x100] sm:$0xff]
        %v1017 = vld [vmem:[%s5 + $0x108] sm:$0xff]
        %v1018 = vld [vmem:[%s5 + $0x110] sm:$0xff]
        %v1019 = vld [vmem:[%s5 + $0x118] sm:$0xff]
        %v1020 = vld [vmem:[%s5 + $0x120] sm:$0xff]
        %v1021 = vld [vmem:[%s5 + $0x128] sm:$0xff]
        %v1022 = vld [vmem:[%s5 + $0x130] sm:$0xff]
        %v1023 = vld [vmem:[%s5 + $0x138] sm:$0xff]
        %v1024 = vld [vmem:[%s5 + $0x140] sm:$0xff]
        %v1025 = vld [vmem:[%s5 + $0x148] sm:$0xff]
        %v1026 = vld [vmem:[%s5 + $0x150] sm:$0xff]
        %v1027 = vld [vmem:[%s5 + $0x158] sm:$0xff]
        %v1028 = vld [vmem:[%s5 + $0x160] sm:$0xff]
        %v1029 = vld [vmem:[%s5 + $0x168] sm:$0xff]
        %v1030 = vld [vmem:[%s5 + $0x170] sm:$0xff]
        %v1031 = vld [vmem:[%s5 + $0x178] sm:$0xff]
        %v1032 = vld [vmem:[%s5 + $0x180] sm:$0xff]
        %v1033 = vld [vmem:[%s5 + $0x188] sm:$0xff]
        %v1034 = vld [vmem:[%s5 + $0x190] sm:$0xff]
        %v1035 = vld [vmem:[%s5 + $0x198] sm:$0xff]
        %v1036 = vld [vmem:[%s5 + $0x1a0] sm:$0xff]
        %v1037 = vld [vmem:[%s5 + $0x1a8] sm:$0xff]
        %v1038 = vld [vmem:[%s5 + $0x1b0] sm:$0xff]
        %v1039 = vld [vmem:[%s5 + $0x1b8] sm:$0xff]
        %v1040 = vld [vmem:[%s5 + $0x1c0] sm:$0xff]
        %v1041 = vld [vmem:[%s5 + $0x1c8] sm:$0xff]
        %v1042 = vld [vmem:[%s5 + $0x1d0] sm:$0xff]
        %v1043 = vld [vmem:[%s5 + $0x1d8] sm:$0xff]
        %v1044 = vld [vmem:[%s5 + $0x1e0] sm:$0xff]
        %v1045 = vld [vmem:[%s5 + $0x1e8] sm:$0xff]
        %v1046 = vld [vmem:[%s5 + $0x1f0] sm:$0xff]
        %v1047 = vld [vmem:[%s5 + $0x1f8] sm:$0xff]
        %v1048 = vld [vmem:[%s5 + $0x200] sm:$0xff]
        %v1049 = vld [vmem:[%s5 + $0x208] sm:$0xff]
        %v1050 = vld [vmem:[%s5 + $0x210] sm:$0xff]
        %v1051 = vld [vmem:[%s5 + $0x218] sm:$0xff]
        %v1052 = vld [vmem:[%s5 + $0x220] sm:$0xff]
        %v1053 = vld [vmem:[%s5 + $0x228] sm:$0xff]
        %v1054 = vld [vmem:[%s5 + $0x230] sm:$0xff]
        %v1055 = vld [vmem:[%s5 + $0x238] sm:$0xff]
        %v1056 = vld [vmem:[%s5 + $0x240] sm:$0xff]
        %v1057 = vld [vmem:[%s5 + $0x248] sm:$0xff]
        %v1058 = vld [vmem:[%s5 + $0x250] sm:$0xff]
        %v1059 = vld [vmem:[%s5 + $0x258] sm:$0xff]
        %v1060 = vld [vmem:[%s5 + $0x260] sm:$0xff]
        %v1061 = vld [vmem:[%s5 + $0x268] sm:$0xff]
        %v1062 = vld [vmem:[%s5 + $0x270] sm:$0xff]
        %v1063 = vld [vmem:[%s5 + $0x278] sm:$0xff]
        %v1064 = vld [vmem:[%s5 + $0x280] sm:$0xff]
        %v1065 = vld [vmem:[%s5 + $0x288] sm:$0xff]
        %v1066 = vld [vmem:[%s5 + $0x290] sm:$0xff]
        %v1067 = vld [vmem:[%s5 + $0x298] sm:$0xff]
        %v1068 = vld [vmem:[%s5 + $0x2a0] sm:$0xff]
        %v1069 = vld [vmem:[%s5 + $0x2a8] sm:$0xff]
        %v1070 = vld [vmem:[%s5 + $0x2b0] sm:$0xff]
        %v1071 = vld [vmem:[%s5 + $0x2b8] sm:$0xff]
        %v1072 = vld [vmem:[%s5 + $0x2c0] sm:$0xff]
        %v1073 = vld [vmem:[%s5 + $0x2c8] sm:$0xff]
        %v1074 = vld [vmem:[%s5 + $0x2d0] sm:$0xff]
        %v1075 = vld [vmem:[%s5 + $0x2d8] sm:$0xff]
        %v1076 = vld [vmem:[%s5 + $0x2e0] sm:$0xff]
        %v1077 = vld [vmem:[%s5 + $0x2e8] sm:$0xff]
        %v1078 = vld [vmem:[%s5 + $0x2f0] sm:$0xff]
        %v1079 = vld [vmem:[%s5 + $0x2f8] sm:$0xff]
        %v1080 = vld [vmem:[%s5 + $0x300] sm:$0xff]
        %v1081 = vld [vmem:[%s5 + $0x308] sm:$0xff]
        %v1082 = vld [vmem:[%s5 + $0x310] sm:$0xff]
        %v1083 = vld [vmem:[%s5 + $0x318] sm:$0xff]
        %v1084 = vld [vmem:[%s5 + $0x320] sm:$0xff]
        %v1085 = vld [vmem:[%s5 + $0x328] sm:$0xff]
        %v1086 = vld [vmem:[%s5 + $0x330] sm:$0xff]
        %v1087 = vld [vmem:[%s5 + $0x338] sm:$0xff]
        %v1088 = vld [vmem:[%s5 + $0x340] sm:$0xff]
        %v1089 = vld [vmem:[%s5 + $0x348] sm:$0xff]
        %v1090 = vld [vmem:[%s5 + $0x350] sm:$0xff]
        %v1091 = vld [vmem:[%s5 + $0x358] sm:$0xff]
        %v1092 = vld [vmem:[%s5 + $0x360] sm:$0xff]
        %v1093 = vld [vmem:[%s5 + $0x368] sm:$0xff]
        %v1094 = vld [vmem:[%s5 + $0x370] sm:$0xff]
        %v1095 = vld [vmem:[%s5 + $0x378] sm:$0xff]
        %v1096 = vld [vmem:[%s5 + $0x380] sm:$0xff]
        %v1097 = vld [vmem:[%s5 + $0x388] sm:$0xff]
        %v1098 = vld [vmem:[%s5 + $0x390] sm:$0xff]
        %v1099 = vld [vmem:[%s5 + $0x398] sm:$0xff]
        %v1100 = vld [vmem:[%s5 + $0x3a0] sm:$0xff]
        %v1101 = vld [vmem:[%s5 + $0x3a8] sm:$0xff]
        %v1102 = vld [vmem:[%s5 + $0x3b0] sm:$0xff]
        %v1103 = vld [vmem:[%s5 + $0x3b8] sm:$0xff]
        %v1104 = vld [vmem:[%s5 + $0x3c0] sm:$0xff]
        %v1105 = vld [vmem:[%s5 + $0x3c8] sm:$0xff]
        %v1106 = vld [vmem:[%s5 + $0x3d0] sm:$0xff]
        %v1107 = vld [vmem:[%s5 + $0x3d8] sm:$0xff]
        %v1108 = vld [vmem:[%s5 + $0x3e0] sm:$0xff]
        %v1109 = vld [vmem:[%s5 + $0x3e8] sm:$0xff]
        %v1110 = vld [vmem:[%s5 + $0x3f0] sm:$0xff]
        %v1111 = vld [vmem:[%s5 + $0x3f8] sm:$0xff]
        %v1112 = vld [vmem:[%s5 + $0x400] sm:$0xff]
        %v1113 = vld [vmem:[%s5 + $0x408] sm:$0xff]
        %v1114 = vld [vmem:[%s5 + $0x410] sm:$0xff]
        %v1115 = vld [vmem:[%s5 + $0x418] sm:$0xff]
        %v1116 = vld [vmem:[%s5 + $0x420] sm:$0xff]
        %v1117 = vld [vmem:[%s5 + $0x428] sm:$0xff]
        %v1118 = vld [vmem:[%s5 + $0x430] sm:$0xff]
        %v1119 = vld [vmem:[%s5 + $0x438] sm:$0xff]
        %v1120 = vld [vmem:[%s5 + $0x440] sm:$0xff]
        %v1121 = vld [vmem:[%s5 + $0x448] sm:$0xff]
        %v1122 = vld [vmem:[%s5 + $0x450] sm:$0xff]
        %v1123 = vld [vmem:[%s5 + $0x458] sm:$0xff]
        %v1124 = vld [vmem:[%s5 + $0x460] sm:$0xff]
        %v1125 = vld [vmem:[%s5 + $0x468] sm:$0xff]
        %v1126 = vld [vmem:[%s5 + $0x470] sm:$0xff]
        %v1127 = vld [vmem:[%s5 + $0x478] sm:$0xff]
        %v1128 = vld [vmem:[%s5 + $0x480] sm:$0xff]
        %v1129 = vld [vmem:[%s5 + $0x488] sm:$0xff]
        %v1130 = vld [vmem:[%s5 + $0x490] sm:$0xff]
        %v1131 = vld [vmem:[%s5 + $0x498] sm:$0xff]
        %v1132 = vld [vmem:[%s5 + $0x4a0] sm:$0xff]
        %v1133 = vld [vmem:[%s5 + $0x4a8] sm:$0xff]
        %v1134 = vld [vmem:[%s5 + $0x4b0] sm:$0xff]
        %v1135 = vld [vmem:[%s5 + $0x4b8] sm:$0xff]
        %v1136 = vld [vmem:[%s5 + $0x4c0] sm:$0xff]
        %v1137 = vld [vmem:[%s5 + $0x4c8] sm:$0xff]
        %v1138 = vld [vmem:[%s5 + $0x4d0] sm:$0xff]
        %v1139 = vld [vmem:[%s5 + $0x4d8] sm:$0xff]
        %v1140 = vld [vmem:[%s5 + $0x4e0] sm:$0xff]
        %v1141 = vld [vmem:[%s5 + $0x4e8] sm:$0xff]
        %v1142 = vld [vmem:[%s5 + $0x4f0] sm:$0xff]
        %v1143 = vld [vmem:[%s5 + $0x4f8] sm:$0xff]
        %v1144 = vld [vmem:[%s5 + $0x500] sm:$0xff]
        %v1145 = vld [vmem:[%s5 + $0x508] sm:$0xff]
        %v1146 = vld [vmem:[%s5 + $0x510] sm:$0xff]
        %v1147 = vld [vmem:[%s5 + $0x518] sm:$0xff]
        %v1148 = vld [vmem:[%s5 + $0x520] sm:$0xff]
        %v1149 = vld [vmem:[%s5 + $0x528] sm:$0xff]
        %v1150 = vld [vmem:[%s5 + $0x530] sm:$0xff]
        %v1151 = vld [vmem:[%s5 + $0x538] sm:$0xff]
        %v1152 = vld [vmem:[%s5 + $0x540] sm:$0xff]
        %v1153 = vld [vmem:[%s5 + $0x548] sm:$0xff]
        %v1154 = vld [vmem:[%s5 + $0x550] sm:$0xff]
        %v1155 = vld [vmem:[%s5 + $0x558] sm:$0xff]
        %v1156 = vld [vmem:[%s5 + $0x560] sm:$0xff]
        %v1157 = vld [vmem:[%s5 + $0x568] sm:$0xff]
        %v1158 = vld [vmem:[%s5 + $0x570] sm:$0xff]
        %v1159 = vld [vmem:[%s5 + $0x578] sm:$0xff]
        %v1160 = vld [vmem:[%s5 + $0x580] sm:$0xff]
        %v1161 = vld [vmem:[%s5 + $0x588] sm:$0xff]
        %v1162 = vld [vmem:[%s5 + $0x590] sm:$0xff]
        %v1163 = vld [vmem:[%s5 + $0x598] sm:$0xff]
        %v1164 = vld [vmem:[%s5 + $0x5a0] sm:$0xff]
        %v1165 = vld [vmem:[%s5 + $0x5a8] sm:$0xff]
        %v1166 = vld [vmem:[%s5 + $0x5b0] sm:$0xff]
        %v1167 = vld [vmem:[%s5 + $0x5b8] sm:$0xff]
        %v1168 = vld [vmem:[%s5 + $0x5c0] sm:$0xff]
        %v1169 = vld [vmem:[%s5 + $0x5c8] sm:$0xff]
        %v1170 = vld [vmem:[%s5 + $0x5d0] sm:$0xff]
        %v1171 = vld [vmem:[%s5 + $0x5d8] sm:$0xff]
        %v1172 = vld [vmem:[%s5 + $0x5e0] sm:$0xff]
        %v1173 = vld [vmem:[%s5 + $0x5e8] sm:$0xff]
        %v1174 = vld [vmem:[%s5 + $0x5f0] sm:$0xff]
        %v1175 = vld [vmem:[%s5 + $0x5f8] sm:$0xff]
        %v1176 = vld [vmem:[%s5 + $0x600] sm:$0xff]
        %v1177 = vld [vmem:[%s5 + $0x608] sm:$0xff]
        %v1178 = vld [vmem:[%s5 + $0x610] sm:$0xff]
        %v1179 = vld [vmem:[%s5 + $0x618] sm:$0xff]
        %v1180 = vld [vmem:[%s5 + $0x620] sm:$0xff]
        %v1181 = vld [vmem:[%s5 + $0x628] sm:$0xff]
        %v1182 = vld [vmem:[%s5 + $0x630] sm:$0xff]
        %v1183 = vld [vmem:[%s5 + $0x638] sm:$0xff]
        %v1184 = vld [vmem:[%s5 + $0x640] sm:$0xff]
        %v1185 = vld [vmem:[%s5 + $0x648] sm:$0xff]
        %v1186 = vld [vmem:[%s5 + $0x650] sm:$0xff]
        %v1187 = vld [vmem:[%s5 + $0x658] sm:$0xff]
        %v1188 = vld [vmem:[%s5 + $0x660] sm:$0xff]
        %v1189 = vld [vmem:[%s5 + $0x668] sm:$0xff]
        %v1190 = vld [vmem:[%s5 + $0x670] sm:$0xff]
        %v1191 = vld [vmem:[%s5 + $0x678] sm:$0xff]
        %v1192 = vld [vmem:[%s5 + $0x680] sm:$0xff]
        %v1193 = vld [vmem:[%s5 + $0x688] sm:$0xff]
        %v1194 = vld [vmem:[%s5 + $0x690] sm:$0xff]
        %v1195 = vld [vmem:[%s5 + $0x698] sm:$0xff]
        %v1196 = vld [vmem:[%s5 + $0x6a0] sm:$0xff]
        %v1197 = vld [vmem:[%s5 + $0x6a8] sm:$0xff]
        %v1198 = vld [vmem:[%s5 + $0x6b0] sm:$0xff]
        %v1199 = vld [vmem:[%s5 + $0x6b8] sm:$0xff]
        %v1200 = vld [vmem:[%s5 + $0x6c0] sm:$0xff]
        %v1201 = vld [vmem:[%s5 + $0x6c8] sm:$0xff]
        %v1202 = vld [vmem:[%s5 + $0x6d0] sm:$0xff]
        %v1203 = vld [vmem:[%s5 + $0x6d8] sm:$0xff]
        %v1204 = vld [vmem:[%s5 + $0x6e0] sm:$0xff]
        %v1205 = vld [vmem:[%s5 + $0x6e8] sm:$0xff]
        %v1206 = vld [vmem:[%s5 + $0x6f0] sm:$0xff]
        %v1207 = vld [vmem:[%s5 + $0x6f8] sm:$0xff]
        %v1208 = vld [vmem:[%s5 + $0x700] sm:$0xff]
        %v1209 = vld [vmem:[%s5 + $0x708] sm:$0xff]
        %v1210 = vld [vmem:[%s5 + $0x710] sm:$0xff]
        %v1211 = vld [vmem:[%s5 + $0x718] sm:$0xff]
        %v1212 = vld [vmem:[%s5 + $0x720] sm:$0xff]
        %v1213 = vld [vmem:[%s5 + $0x728] sm:$0xff]
        %v1214 = vld [vmem:[%s5 + $0x730] sm:$0xff]
        %v1215 = vld [vmem:[%s5 + $0x738] sm:$0xff]
        %v1216 = vld [vmem:[%s5 + $0x740] sm:$0xff]
        %v1217 = vld [vmem:[%s5 + $0x748] sm:$0xff]
        %v1218 = vld [vmem:[%s5 + $0x750] sm:$0xff]
        %v1219 = vld [vmem:[%s5 + $0x758] sm:$0xff]
        %v1220 = vld [vmem:[%s5 + $0x760] sm:$0xff]
        %v1221 = vld [vmem:[%s5 + $0x768] sm:$0xff]
        %v1222 = vld [vmem:[%s5 + $0x770] sm:$0xff]
        %v1223 = vld [vmem:[%s5 + $0x778] sm:$0xff]
        %v1224 = vld [vmem:[%s5 + $0x780] sm:$0xff]
        %v1225 = vld [vmem:[%s5 + $0x788] sm:$0xff]
        %v1226 = vld [vmem:[%s5 + $0x790] sm:$0xff]
        %v1227 = vld [vmem:[%s5 + $0x798] sm:$0xff]
        %v1228 = vld [vmem:[%s5 + $0x7a0] sm:$0xff]
        %v1229 = vld [vmem:[%s5 + $0x7a8] sm:$0xff]
        %v1230 = vld [vmem:[%s5 + $0x7b0] sm:$0xff]
        %v1231 = vld [vmem:[%s5 + $0x7b8] sm:$0xff]
        %v1232 = vld [vmem:[%s5 + $0x7c0] sm:$0xff]
        %v1233 = vld [vmem:[%s5 + $0x7c8] sm:$0xff]
        %v1234 = vld [vmem:[%s5 + $0x7d0] sm:$0xff]
        %v1235 = vld [vmem:[%s5 + $0x7d8] sm:$0xff]
        %v1236 = vld [vmem:[%s5 + $0x7e0] sm:$0xff]
        %v1237 = vld [vmem:[%s5 + $0x7e8] sm:$0xff]
        %v1238 = vld [vmem:[%s5 + $0x7f0] sm:$0xff]
        %v1239 = vld [vmem:[%s5 + $0x7f8] sm:$0xff]
        %v1240 = vld [vmem:[%s6] sm:$0xf]
        %v1242 = vperm.slane %v1240, 0
        %v1243 = vperm.slane %v1240, 1
        %v1244 = vperm.slane %v1240, 2
        %v1245 = vperm.slane %v1240, 3
        %1250 = vmatpush.msra.mxu0 %v1044
        %1251 = vmatpush.msra.mxu0 %v1040
        %1252 = vmatpush.msra.mxu0 %v1036
        %1253 = vmatpush.msra.mxu0 %v1032
        %1254 = vmatpush.msra.mxu0 %v1028
        %1255 = vmatpush.msra.mxu0 %v1024
        %1256 = vmatpush.msra.mxu0 %v1020
        %1257 = vmatpush.msra.mxu0 %v1016
        %1258 = vmatpush.msra.mxu0 %v1012
        %1259 = vmatpush.msra.mxu0 %v1008
        %1260 = vmatpush.msra.mxu0 %v1004
        %1261 = vmatpush.msra.mxu0 %v1000
        %1262 = vmatpush.msra.mxu0 %v996
        %1263 = vmatpush.msra.mxu0 %v992
        %1264 = vmatpush.msra.mxu0 %v988
        %1265 = vmatpush.msra.mxu0 %v984
        %1266 = vmatmul.f32.gmra.mxu0 %v980
        %v1267 = vpop.f32.mrf.mxu0
        %v1268 = vadd.f32 %v1242, %v1267
        %1269 = vdwg.mxu0
        %1270 = vmatpush.msra.mxu0 %v1108
        %1271 = vmatpush.msra.mxu0 %v1104
        %1272 = vmatpush.msra.mxu0 %v1100
        %1273 = vmatpush.msra.mxu0 %v1096
        %1274 = vmatpush.msra.mxu0 %v1092
        %1275 = vmatpush.msra.mxu0 %v1088
        %1276 = vmatpush.msra.mxu0 %v1084
        %1277 = vmatpush.msra.mxu0 %v1080
        %1278 = vmatpush.msra.mxu0 %v1076
        %1279 = vmatpush.msra.mxu0 %v1072
        %1280 = vmatpush.msra.mxu0 %v1068
        %1281 = vmatpush.msra.mxu0 %v1064
        %1282 = vmatpush.msra.mxu0 %v1060
        %1283 = vmatpush.msra.mxu0 %v1056
        %1284 = vmatpush.msra.mxu0 %v1052
        %1285 = vmatpush.msra.mxu0 %v1048
        %1286 = vmatmul.f32.gmra.mxu0 %v981
        %v1287 = vpop.f32.mrf.mxu0
        %v1288 = vadd.f32 %v1268, %v1287
        %1289 = vdwg.mxu0
        %1290 = vmatpush.msra.mxu0 %v1172
        %1291 = vmatpush.msra.mxu0 %v1168
        %1292 = vmatpush.msra.mxu0 %v1164
        %1293 = vmatpush.msra.mxu0 %v1160
        %1294 = vmatpush.msra.mxu0 %v1156
        %1295 = vmatpush.msra.mxu0 %v1152
        %1296 = vmatpush.msra.mxu0 %v1148
        %1297 = vmatpush.msra.mxu0 %v1144
        %1298 = vmatpush.msra.mxu0 %v1140
        %1299 = vmatpush.msra.mxu0 %v1136
        %1300 = vmatpush.msra.mxu0 %v1132
        %1301 = vmatpush.msra.mxu0 %v1128
        %1302 = vmatpush.msra.mxu0 %v1124
        %1303 = vmatpush.msra.mxu0 %v1120
        %1304 = vmatpush.msra.mxu0 %v1116
        %1305 = vmatpush.msra.mxu0 %v1112
        %1306 = vmatmul.f32.gmra.mxu0 %v982
        %v1307 = vpop.f32.mrf.mxu0
        %v1308 = vadd.f32 %v1288, %v1307
        %1309 = vdwg.mxu0
        %1310 = vmatpush.msra.mxu0 %v1236
        %1311 = vmatpush.msra.mxu0 %v1232
        %1312 = vmatpush.msra.mxu0 %v1228
        %1313 = vmatpush.msra.mxu0 %v1224
        %1314 = vmatpush.msra.mxu0 %v1220
        %1315 = vmatpush.msra.mxu0 %v1216
        %1316 = vmatpush.msra.mxu0 %v1212
        %1317 = vmatpush.msra.mxu0 %v1208
        %1318 = vmatpush.msra.mxu0 %v1204
        %1319 = vmatpush.msra.mxu0 %v1200
        %1320 = vmatpush.msra.mxu0 %v1196
        %1321 = vmatpush.msra.mxu0 %v1192
        %1322 = vmatpush.msra.mxu0 %v1188
        %1323 = vmatpush.msra.mxu0 %v1184
        %1324 = vmatpush.msra.mxu0 %v1180
        %1325 = vmatpush.msra.mxu0 %v1176
        %1326 = vmatmul.f32.gmra.mxu0 %v983
        %v1327 = vpop.f32.mrf.mxu0
        %v1328 = vadd.f32 %v1308, %v1327
        %1329 = vdwg.mxu0
        %1330 = vmatpush.msra.mxu0 %v1045
        %1331 = vmatpush.msra.mxu0 %v1041
        %1332 = vmatpush.msra.mxu0 %v1037
        %1333 = vmatpush.msra.mxu0 %v1033
        %1334 = vmatpush.msra.mxu0 %v1029
        %1335 = vmatpush.msra.mxu0 %v1025
        %1336 = vmatpush.msra.mxu0 %v1021
        %1337 = vmatpush.msra.mxu0 %v1017
        %1338 = vmatpush.msra.mxu0 %v1013
        %1339 = vmatpush.msra.mxu0 %v1009
        %1340 = vmatpush.msra.mxu0 %v1005
        %1341 = vmatpush.msra.mxu0 %v1001
        %1342 = vmatpush.msra.mxu0 %v997
        %1343 = vmatpush.msra.mxu0 %v993
        %1344 = vmatpush.msra.mxu0 %v989
        %1345 = vmatpush.msra.mxu0 %v985
        %1346 = vmatmul.f32.gmra.mxu0 %v980
        %v1347 = vpop.f32.mrf.mxu0
        %v1348 = vadd.f32 %v1243, %v1347
        %1349 = vdwg.mxu0
        %1350 = vmatpush.msra.mxu0 %v1109
        %1351 = vmatpush.msra.mxu0 %v1105
        %1352 = vmatpush.msra.mxu0 %v1101
        %1353 = vmatpush.msra.mxu0 %v1097
        %1354 = vmatpush.msra.mxu0 %v1093
        %1355 = vmatpush.msra.mxu0 %v1089
        %1356 = vmatpush.msra.mxu0 %v1085
        %1357 = vmatpush.msra.mxu0 %v1081
        %1358 = vmatpush.msra.mxu0 %v1077
        %1359 = vmatpush.msra.mxu0 %v1073
        %1360 = vmatpush.msra.mxu0 %v1069
        %1361 = vmatpush.msra.mxu0 %v1065
        %1362 = vmatpush.msra.mxu0 %v1061
        %1363 = vmatpush.msra.mxu0 %v1057
        %1364 = vmatpush.msra.mxu0 %v1053
        %1365 = vmatpush.msra.mxu0 %v1049
        %1366 = vmatmul.f32.gmra.mxu0 %v981
        %v1367 = vpop.f32.mrf.mxu0
        %v1368 = vadd.f32 %v1348, %v1367
        %1369 = vdwg.mxu0
        %1370 = vmatpush.msra.mxu0 %v1173
        %1371 = vmatpush.msra.mxu0 %v1169
        %1372 = vmatpush.msra.mxu0 %v1165
        %1373 = vmatpush.msra.mxu0 %v1161
        %1374 = vmatpush.msra.mxu0 %v1157
        %1375 = vmatpush.msra.mxu0 %v1153
        %1376 = vmatpush.msra.mxu0 %v1149
        %1377 = vmatpush.msra.mxu0 %v1145
        %1378 = vmatpush.msra.mxu0 %v1141
        %1379 = vmatpush.msra.mxu0 %v1137
        %1380 = vmatpush.msra.mxu0 %v1133
        %1381 = vmatpush.msra.mxu0 %v1129
        %1382 = vmatpush.msra.mxu0 %v1125
        %1383 = vmatpush.msra.mxu0 %v1121
        %1384 = vmatpush.msra.mxu0 %v1117
        %1385 = vmatpush.msra.mxu0 %v1113
        %1386 = vmatmul.f32.gmra.mxu0 %v982
        %v1387 = vpop.f32.mrf.mxu0
        %v1388 = vadd.f32 %v1368, %v1387
        %1389 = vdwg.mxu0
        %1390 = vmatpush.msra.mxu0 %v1237
        %1391 = vmatpush.msra.mxu0 %v1233
        %1392 = vmatpush.msra.mxu0 %v1229
        %1393 = vmatpush.msra.mxu0 %v1225
        %1394 = vmatpush.msra.mxu0 %v1221
        %1395 = vmatpush.msra.mxu0 %v1217
        %1396 = vmatpush.msra.mxu0 %v1213
        %1397 = vmatpush.msra.mxu0 %v1209
        %1398 = vmatpush.msra.mxu0 %v1205
        %1399 = vmatpush.msra.mxu0 %v1201
        %1400 = vmatpush.msra.mxu0 %v1197
        %1401 = vmatpush.msra.mxu0 %v1193
        %1402 = vmatpush.msra.mxu0 %v1189
        %1403 = vmatpush.msra.mxu0 %v1185
        %1404 = vmatpush.msra.mxu0 %v1181
        %1405 = vmatpush.msra.mxu0 %v1177
        %1406 = vmatmul.f32.gmra.mxu0 %v983
        %v1407 = vpop.f32.mrf.mxu0
        %v1408 = vadd.f32 %v1388, %v1407
        %1409 = vdwg.mxu0
        %1410 = vmatpush.msra.mxu0 %v1046
        %1411 = vmatpush.msra.mxu0 %v1042
        %1412 = vmatpush.msra.mxu0 %v1038
        %1413 = vmatpush.msra.mxu0 %v1034
        %1414 = vmatpush.msra.mxu0 %v1030
        %1415 = vmatpush.msra.mxu0 %v1026
        %1416 = vmatpush.msra.mxu0 %v1022
        %1417 = vmatpush.msra.mxu0 %v1018
        %1418 = vmatpush.msra.mxu0 %v1014
        %1419 = vmatpush.msra.mxu0 %v1010
        %1420 = vmatpush.msra.mxu0 %v1006
        %1421 = vmatpush.msra.mxu0 %v1002
        %1422 = vmatpush.msra.mxu0 %v998
        %1423 = vmatpush.msra.mxu0 %v994
        %1424 = vmatpush.msra.mxu0 %v990
        %1425 = vmatpush.msra.mxu0 %v986
        %1426 = vmatmul.f32.gmra.mxu0 %v980
        %v1427 = vpop.f32.mrf.mxu0
        %v1428 = vadd.f32 %v1244, %v1427
        %1429 = vdwg.mxu0
        %1430 = vmatpush.msra.mxu0 %v1110
        %1431 = vmatpush.msra.mxu0 %v1106
        %1432 = vmatpush.msra.mxu0 %v1102
        %1433 = vmatpush.msra.mxu0 %v1098
        %1434 = vmatpush.msra.mxu0 %v1094
        %1435 = vmatpush.msra.mxu0 %v1090
        %1436 = vmatpush.msra.mxu0 %v1086
        %1437 = vmatpush.msra.mxu0 %v1082
        %1438 = vmatpush.msra.mxu0 %v1078
        %1439 = vmatpush.msra.mxu0 %v1074
        %1440 = vmatpush.msra.mxu0 %v1070
        %1441 = vmatpush.msra.mxu0 %v1066
        %1442 = vmatpush.msra.mxu0 %v1062
        %1443 = vmatpush.msra.mxu0 %v1058
        %1444 = vmatpush.msra.mxu0 %v1054
        %1445 = vmatpush.msra.mxu0 %v1050
        %1446 = vmatmul.f32.gmra.mxu0 %v981
        %v1447 = vpop.f32.mrf.mxu0
        %v1448 = vadd.f32 %v1428, %v1447
        %1449 = vdwg.mxu0
        %1450 = vmatpush.msra.mxu0 %v1174
        %1451 = vmatpush.msra.mxu0 %v1170
        %1452 = vmatpush.msra.mxu0 %v1166
        %1453 = vmatpush.msra.mxu0 %v1162
        %1454 = vmatpush.msra.mxu0 %v1158
        %1455 = vmatpush.msra.mxu0 %v1154
        %1456 = vmatpush.msra.mxu0 %v1150
        %1457 = vmatpush.msra.mxu0 %v1146
        %1458 = vmatpush.msra.mxu0 %v1142
        %1459 = vmatpush.msra.mxu0 %v1138
        %1460 = vmatpush.msra.mxu0 %v1134
        %1461 = vmatpush.msra.mxu0 %v1130
        %1462 = vmatpush.msra.mxu0 %v1126
        %1463 = vmatpush.msra.mxu0 %v1122
        %1464 = vmatpush.msra.mxu0 %v1118
        %1465 = vmatpush.msra.mxu0 %v1114
        %1466 = vmatmul.f32.gmra.mxu0 %v982
        %v1467 = vpop.f32.mrf.mxu0
        %v1468 = vadd.f32 %v1448, %v1467
        %1469 = vdwg.mxu0
        %1470 = vmatpush.msra.mxu0 %v1238
        %1471 = vmatpush.msra.mxu0 %v1234
        %1472 = vmatpush.msra.mxu0 %v1230
        %1473 = vmatpush.msra.mxu0 %v1226
        %1474 = vmatpush.msra.mxu0 %v1222
        %1475 = vmatpush.msra.mxu0 %v1218
        %1476 = vmatpush.msra.mxu0 %v1214
        %1477 = vmatpush.msra.mxu0 %v1210
        %1478 = vmatpush.msra.mxu0 %v1206
        %1479 = vmatpush.msra.mxu0 %v1202
        %1480 = vmatpush.msra.mxu0 %v1198
        %1481 = vmatpush.msra.mxu0 %v1194
        %1482 = vmatpush.msra.mxu0 %v1190
        %1483 = vmatpush.msra.mxu0 %v1186
        %1484 = vmatpush.msra.mxu0 %v1182
        %1485 = vmatpush.msra.mxu0 %v1178
        %1486 = vmatmul.f32.gmra.mxu0 %v983
        %v1487 = vpop.f32.mrf.mxu0
        %v1488 = vadd.f32 %v1468, %v1487
        %1489 = vdwg.mxu0
        %1490 = vmatpush.msra.mxu0 %v1047
        %1491 = vmatpush.msra.mxu0 %v1043
        %1492 = vmatpush.msra.mxu0 %v1039
        %1493 = vmatpush.msra.mxu0 %v1035
        %1494 = vmatpush.msra.mxu0 %v1031
        %1495 = vmatpush.msra.mxu0 %v1027
        %1496 = vmatpush.msra.mxu0 %v1023
        %1497 = vmatpush.msra.mxu0 %v1019
        %1498 = vmatpush.msra.mxu0 %v1015
        %1499 = vmatpush.msra.mxu0 %v1011
        %1500 = vmatpush.msra.mxu0 %v1007
        %1501 = vmatpush.msra.mxu0 %v1003
        %1502 = vmatpush.msra.mxu0 %v999
        %1503 = vmatpush.msra.mxu0 %v995
        %1504 = vmatpush.msra.mxu0 %v991
        %1505 = vmatpush.msra.mxu0 %v987
        %1506 = vmatmul.f32.gmra.mxu0 %v980
        %v1507 = vpop.f32.mrf.mxu0
        %v1508 = vadd.f32 %v1245, %v1507
        %1509 = vdwg.mxu0
        %1510 = vmatpush.msra.mxu0 %v1111
        %1511 = vmatpush.msra.mxu0 %v1107
        %1512 = vmatpush.msra.mxu0 %v1103
        %1513 = vmatpush.msra.mxu0 %v1099
        %1514 = vmatpush.msra.mxu0 %v1095
        %1515 = vmatpush.msra.mxu0 %v1091
        %1516 = vmatpush.msra.mxu0 %v1087
        %1517 = vmatpush.msra.mxu0 %v1083
        %1518 = vmatpush.msra.mxu0 %v1079
        %1519 = vmatpush.msra.mxu0 %v1075
        %1520 = vmatpush.msra.mxu0 %v1071
        %1521 = vmatpush.msra.mxu0 %v1067
        %1522 = vmatpush.msra.mxu0 %v1063
        %1523 = vmatpush.msra.mxu0 %v1059
        %1524 = vmatpush.msra.mxu0 %v1055
        %1525 = vmatpush.msra.mxu0 %v1051
        %1526 = vmatmul.f32.gmra.mxu0 %v981
        %v1527 = vpop.f32.mrf.mxu0
        %v1528 = vadd.f32 %v1508, %v1527
        %1529 = vdwg.mxu0
        %1530 = vmatpush.msra.mxu0 %v1175
        %1531 = vmatpush.msra.mxu0 %v1171
        %1532 = vmatpush.msra.mxu0 %v1167
        %1533 = vmatpush.msra.mxu0 %v1163
        %1534 = vmatpush.msra.mxu0 %v1159
        %1535 = vmatpush.msra.mxu0 %v1155
        %1536 = vmatpush.msra.mxu0 %v1151
        %1537 = vmatpush.msra.mxu0 %v1147
        %1538 = vmatpush.msra.mxu0 %v1143
        %1539 = vmatpush.msra.mxu0 %v1139
        %1540 = vmatpush.msra.mxu0 %v1135
        %1541 = vmatpush.msra.mxu0 %v1131
        %1542 = vmatpush.msra.mxu0 %v1127
        %1543 = vmatpush.msra.mxu0 %v1123
        %1544 = vmatpush.msra.mxu0 %v1119
        %1545 = vmatpush.msra.mxu0 %v1115
        %1546 = vmatmul.f32.gmra.mxu0 %v982
        %v1547 = vpop.f32.mrf.mxu0
        %v1548 = vadd.f32 %v1528, %v1547
        %1549 = vdwg.mxu0
        %1550 = vmatpush.msra.mxu0 %v1239
        %1551 = vmatpush.msra.mxu0 %v1235
        %1552 = vmatpush.msra.mxu0 %v1231
        %1553 = vmatpush.msra.mxu0 %v1227
        %1554 = vmatpush.msra.mxu0 %v1223
        %1555 = vmatpush.msra.mxu0 %v1219
        %1556 = vmatpush.msra.mxu0 %v1215
        %1557 = vmatpush.msra.mxu0 %v1211
        %1558 = vmatpush.msra.mxu0 %v1207
        %1559 = vmatpush.msra.mxu0 %v1203
        %1560 = vmatpush.msra.mxu0 %v1199
        %1561 = vmatpush.msra.mxu0 %v1195
        %1562 = vmatpush.msra.mxu0 %v1191
        %1563 = vmatpush.msra.mxu0 %v1187
        %1564 = vmatpush.msra.mxu0 %v1183
        %1565 = vmatpush.msra.mxu0 %v1179
        %1566 = vmatmul.f32.gmra.mxu0 %v983
        %v1567 = vpop.f32.mrf.mxu0
        %v1568 = vadd.f32 %v1548, %v1567
        %1569 = vdwg.mxu0
        %v1570 = vmax.f32 %v1328, 0.0
        %v1571 = vmax.f32 %v1408, 0.0
        %v1572 = vmax.f32 %v1488, 0.0
        %v1573 = vmax.f32 %v1568, 0.0
        %v1574 = vld [vmem:[%s7] sm:$0xff]
        %v1575 = vld [vmem:[%s7 + $0x8] sm:$0xff]
        %v1576 = vld [vmem:[%s7 + $0x10] sm:$0xff]
        %v1577 = vld [vmem:[%s7 + $0x18] sm:$0xff]
        %v1578 = vld [vmem:[%s7 + $0x20] sm:$0xff]
        %v1579 = vld [vmem:[%s7 + $0x28] sm:$0xff]
        %v1580 = vld [vmem:[%s7 + $0x30] sm:$0xff]
        %v1581 = vld [vmem:[%s7 + $0x38] sm:$0xff]
        %v1582 = vld [vmem:[%s7 + $0x40] sm:$0xff]
        %v1583 = vld [vmem:[%s7 + $0x48] sm:$0xff]
        %v1584 = vld [vmem:[%s7 + $0x50] sm:$0xff]
        %v1585 = vld [vmem:[%s7 + $0x58] sm:$0xff]
        %v1586 = vld [vmem:[%s7 + $0x60] sm:$0xff]
        %v1587 = vld [vmem:[%s7 + $0x68] sm:$0xff]
        %v1588 = vld [vmem:[%s7 + $0x70] sm:$0xff]
        %v1589 = vld [vmem:[%s7 + $0x78] sm:$0xff]
        %v1590 = vld [vmem:[%s7 + $0x80] sm:$0xff]
        %v1591 = vld [vmem:[%s7 + $0x88] sm:$0xff]
        %v1592 = vld [vmem:[%s7 + $0x90] sm:$0xff]
        %v1593 = vld [vmem:[%s7 + $0x98] sm:$0xff]
        %v1594 = vld [vmem:[%s7 + $0xa0] sm:$0xff]
        %v1595 = vld [vmem:[%s7 + $0xa8] sm:$0xff]
        %v1596 = vld [vmem:[%s7 + $0xb0] sm:$0xff]
        %v1597 = vld [vmem:[%s7 + $0xb8] sm:$0xff]
        %v1598 = vld [vmem:[%s7 + $0xc0] sm:$0xff]
        %v1599 = vld [vmem:[%s7 + $0xc8] sm:$0xff]
        %v1600 = vld [vmem:[%s7 + $0xd0] sm:$0xff]
        %v1601 = vld [vmem:[%s7 + $0xd8] sm:$0xff]
        %v1602 = vld [vmem:[%s7 + $0xe0] sm:$0xff]
        %v1603 = vld [vmem:[%s7 + $0xe8] sm:$0xff]
        %v1604 = vld [vmem:[%s7 + $0xf0] sm:$0xff]
        %v1605 = vld [vmem:[%s7 + $0xf8] sm:$0xff]
        %v1606 = vld [vmem:[%s7 + $0x100] sm:$0xff]
        %v1607 = vld [vmem:[%s7 + $0x108] sm:$0xff]
        %v1608 = vld [vmem:[%s7 + $0x110] sm:$0xff]
        %v1609 = vld [vmem:[%s7 + $0x118] sm:$0xff]
        %v1610 = vld [vmem:[%s7 + $0x120] sm:$0xff]
        %v1611 = vld [vmem:[%s7 + $0x128] sm:$0xff]
        %v1612 = vld [vmem:[%s7 + $0x130] sm:$0xff]
        %v1613 = vld [vmem:[%s7 + $0x138] sm:$0xff]
        %v1614 = vld [vmem:[%s7 + $0x140] sm:$0xff]
        %v1615 = vld [vmem:[%s7 + $0x148] sm:$0xff]
        %v1616 = vld [vmem:[%s7 + $0x150] sm:$0xff]
        %v1617 = vld [vmem:[%s7 + $0x158] sm:$0xff]
        %v1618 = vld [vmem:[%s7 + $0x160] sm:$0xff]
        %v1619 = vld [vmem:[%s7 + $0x168] sm:$0xff]
        %v1620 = vld [vmem:[%s7 + $0x170] sm:$0xff]
        %v1621 = vld [vmem:[%s7 + $0x178] sm:$0xff]
        %v1622 = vld [vmem:[%s7 + $0x180] sm:$0xff]
        %v1623 = vld [vmem:[%s7 + $0x188] sm:$0xff]
        %v1624 = vld [vmem:[%s7 + $0x190] sm:$0xff]
        %v1625 = vld [vmem:[%s7 + $0x198] sm:$0xff]
        %v1626 = vld [vmem:[%s7 + $0x1a0] sm:$0xff]
        %v1627 = vld [vmem:[%s7 + $0x1a8] sm:$0xff]
        %v1628 = vld [vmem:[%s7 + $0x1b0] sm:$0xff]
        %v1629 = vld [vmem:[%s7 + $0x1b8] sm:$0xff]
        %v1630 = vld [vmem:[%s7 + $0x1c0] sm:$0xff]
        %v1631 = vld [vmem:[%s7 + $0x1c8] sm:$0xff]
        %v1632 = vld [vmem:[%s7 + $0x1d0] sm:$0xff]
        %v1633 = vld [vmem:[%s7 + $0x1d8] sm:$0xff]
        %v1634 = vld [vmem:[%s7 + $0x1e0] sm:$0xff]
        %v1635 = vld [vmem:[%s7 + $0x1e8] sm:$0xff]
        %v1636 = vld [vmem:[%s7 + $0x1f0] sm:$0xff]
        %v1637 = vld [vmem:[%s7 + $0x1f8] sm:$0xff]
        %v1638 = vld [vmem:[%s7 + $0x200] sm:$0xff]
        %v1639 = vld [vmem:[%s7 + $0x208] sm:$0xff]
        %v1640 = vld [vmem:[%s7 + $0x210] sm:$0xff]
        %v1641 = vld [vmem:[%s7 + $0x218] sm:$0xff]
        %v1642 = vld [vmem:[%s7 + $0x220] sm:$0xff]
        %v1643 = vld [vmem:[%s7 + $0x228] sm:$0xff]
        %v1644 = vld [vmem:[%s7 + $0x230] sm:$0xff]
        %v1645 = vld [vmem:[%s7 + $0x238] sm:$0xff]
        %v1646 = vld [vmem:[%s7 + $0x240] sm:$0xff]
        %v1647 = vld [vmem:[%s7 + $0x248] sm:$0xff]
        %v1648 = vld [vmem:[%s7 + $0x250] sm:$0xff]
        %v1649 = vld [vmem:[%s7 + $0x258] sm:$0xff]
        %v1650 = vld [vmem:[%s7 + $0x260] sm:$0xff]
        %v1651 = vld [vmem:[%s7 + $0x268] sm:$0xff]
        %v1652 = vld [vmem:[%s7 + $0x270] sm:$0xff]
        %v1653 = vld [vmem:[%s7 + $0x278] sm:$0xff]
        %v1654 = vld [vmem:[%s7 + $0x280] sm:$0xff]
        %v1655 = vld [vmem:[%s7 + $0x288] sm:$0xff]
        %v1656 = vld [vmem:[%s7 + $0x290] sm:$0xff]
        %v1657 = vld [vmem:[%s7 + $0x298] sm:$0xff]
        %v1658 = vld [vmem:[%s7 + $0x2a0] sm:$0xff]
        %v1659 = vld [vmem:[%s7 + $0x2a8] sm:$0xff]
        %v1660 = vld [vmem:[%s7 + $0x2b0] sm:$0xff]
        %v1661 = vld [vmem:[%s7 + $0x2b8] sm:$0xff]
        %v1662 = vld [vmem:[%s7 + $0x2c0] sm:$0xff]
        %v1663 = vld [vmem:[%s7 + $0x2c8] sm:$0xff]
        %v1664 = vld [vmem:[%s7 + $0x2d0] sm:$0xff]
        %v1665 = vld [vmem:[%s7 + $0x2d8] sm:$0xff]
        %v1666 = vld [vmem:[%s7 + $0x2e0] sm:$0xff]
        %v1667 = vld [vmem:[%s7 + $0x2e8] sm:$0xff]
        %v1668 = vld [vmem:[%s7 + $0x2f0] sm:$0xff]
        %v1669 = vld [vmem:[%s7 + $0x2f8] sm:$0xff]
        %v1670 = vld [vmem:[%s7 + $0x300] sm:$0xff]
        %v1671 = vld [vmem:[%s7 + $0x308] sm:$0xff]
        %v1672 = vld [vmem:[%s7 + $0x310] sm:$0xff]
        %v1673 = vld [vmem:[%s7 + $0x318] sm:$0xff]
        %v1674 = vld [vmem:[%s7 + $0x320] sm:$0xff]
        %v1675 = vld [vmem:[%s7 + $0x328] sm:$0xff]
        %v1676 = vld [vmem:[%s7 + $0x330] sm:$0xff]
        %v1677 = vld [vmem:[%s7 + $0x338] sm:$0xff]
        %v1678 = vld [vmem:[%s7 + $0x340] sm:$0xff]
        %v1679 = vld [vmem:[%s7 + $0x348] sm:$0xff]
        %v1680 = vld [vmem:[%s7 + $0x350] sm:$0xff]
        %v1681 = vld [vmem:[%s7 + $0x358] sm:$0xff]
        %v1682 = vld [vmem:[%s7 + $0x360] sm:$0xff]
        %v1683 = vld [vmem:[%s7 + $0x368] sm:$0xff]
        %v1684 = vld [vmem:[%s7 + $0x370] sm:$0xff]
        %v1685 = vld [vmem:[%s7 + $0x378] sm:$0xff]
        %v1686 = vld [vmem:[%s7 + $0x380] sm:$0xff]
        %v1687 = vld [vmem:[%s7 + $0x388] sm:$0xff]
        %v1688 = vld [vmem:[%s7 + $0x390] sm:$0xff]
        %v1689 = vld [vmem:[%s7 + $0x398] sm:$0xff]
        %v1690 = vld [vmem:[%s7 + $0x3a0] sm:$0xff]
        %v1691 = vld [vmem:[%s7 + $0x3a8] sm:$0xff]
        %v1692 = vld [vmem:[%s7 + $0x3b0] sm:$0xff]
        %v1693 = vld [vmem:[%s7 + $0x3b8] sm:$0xff]
        %v1694 = vld [vmem:[%s7 + $0x3c0] sm:$0xff]
        %v1695 = vld [vmem:[%s7 + $0x3c8] sm:$0xff]
        %v1696 = vld [vmem:[%s7 + $0x3d0] sm:$0xff]
        %v1697 = vld [vmem:[%s7 + $0x3d8] sm:$0xff]
        %v1698 = vld [vmem:[%s7 + $0x3e0] sm:$0xff]
        %v1699 = vld [vmem:[%s7 + $0x3e8] sm:$0xff]
        %v1700 = vld [vmem:[%s7 + $0x3f0] sm:$0xff]
        %v1701 = vld [vmem:[%s7 + $0x3f8] sm:$0xff]
        %v1702 = vld [vmem:[%s7 + $0x400] sm:$0xff]
        %v1703 = vld [vmem:[%s7 + $0x408] sm:$0xff]
        %v1704 = vld [vmem:[%s7 + $0x410] sm:$0xff]
        %v1705 = vld [vmem:[%s7 + $0x418] sm:$0xff]
        %v1706 = vld [vmem:[%s7 + $0x420] sm:$0xff]
        %v1707 = vld [vmem:[%s7 + $0x428] sm:$0xff]
        %v1708 = vld [vmem:[%s7 + $0x430] sm:$0xff]
        %v1709 = vld [vmem:[%s7 + $0x438] sm:$0xff]
        %v1710 = vld [vmem:[%s7 + $0x440] sm:$0xff]
        %v1711 = vld [vmem:[%s7 + $0x448] sm:$0xff]
        %v1712 = vld [vmem:[%s7 + $0x450] sm:$0xff]
        %v1713 = vld [vmem:[%s7 + $0x458] sm:$0xff]
        %v1714 = vld [vmem:[%s7 + $0x460] sm:$0xff]
        %v1715 = vld [vmem:[%s7 + $0x468] sm:$0xff]
        %v1716 = vld [vmem:[%s7 + $0x470] sm:$0xff]
        %v1717 = vld [vmem:[%s7 + $0x478] sm:$0xff]
        %v1718 = vld [vmem:[%s7 + $0x480] sm:$0xff]
        %v1719 = vld [vmem:[%s7 + $0x488] sm:$0xff]
        %v1720 = vld [vmem:[%s7 + $0x490] sm:$0xff]
        %v1721 = vld [vmem:[%s7 + $0x498] sm:$0xff]
        %v1722 = vld [vmem:[%s7 + $0x4a0] sm:$0xff]
        %v1723 = vld [vmem:[%s7 + $0x4a8] sm:$0xff]
        %v1724 = vld [vmem:[%s7 + $0x4b0] sm:$0xff]
        %v1725 = vld [vmem:[%s7 + $0x4b8] sm:$0xff]
        %v1726 = vld [vmem:[%s7 + $0x4c0] sm:$0xff]
        %v1727 = vld [vmem:[%s7 + $0x4c8] sm:$0xff]
        %v1728 = vld [vmem:[%s7 + $0x4d0] sm:$0xff]
        %v1729 = vld [vmem:[%s7 + $0x4d8] sm:$0xff]
        %v1730 = vld [vmem:[%s7 + $0x4e0] sm:$0xff]
        %v1731 = vld [vmem:[%s7 + $0x4e8] sm:$0xff]
        %v1732 = vld [vmem:[%s7 + $0x4f0] sm:$0xff]
        %v1733 = vld [vmem:[%s7 + $0x4f8] sm:$0xff]
        %v1734 = vld [vmem:[%s7 + $0x500] sm:$0xff]
        %v1735 = vld [vmem:[%s7 + $0x508] sm:$0xff]
        %v1736 = vld [vmem:[%s7 + $0x510] sm:$0xff]
        %v1737 = vld [vmem:[%s7 + $0x518] sm:$0xff]
        %v1738 = vld [vmem:[%s7 + $0x520] sm:$0xff]
        %v1739 = vld [vmem:[%s7 + $0x528] sm:$0xff]
        %v1740 = vld [vmem:[%s7 + $0x530] sm:$0xff]
        %v1741 = vld [vmem:[%s7 + $0x538] sm:$0xff]
        %v1742 = vld [vmem:[%s7 + $0x540] sm:$0xff]
        %v1743 = vld [vmem:[%s7 + $0x548] sm:$0xff]
        %v1744 = vld [vmem:[%s7 + $0x550] sm:$0xff]
        %v1745 = vld [vmem:[%s7 + $0x558] sm:$0xff]
        %v1746 = vld [vmem:[%s7 + $0x560] sm:$0xff]
        %v1747 = vld [vmem:[%s7 + $0x568] sm:$0xff]
        %v1748 = vld [vmem:[%s7 + $0x570] sm:$0xff]
        %v1749 = vld [vmem:[%s7 + $0x578] sm:$0xff]
        %v1750 = vld [vmem:[%s7 + $0x580] sm:$0xff]
        %v1751 = vld [vmem:[%s7 + $0x588] sm:$0xff]
        %v1752 = vld [vmem:[%s7 + $0x590] sm:$0xff]
        %v1753 = vld [vmem:[%s7 + $0x598] sm:$0xff]
        %v1754 = vld [vmem:[%s7 + $0x5a0] sm:$0xff]
        %v1755 = vld [vmem:[%s7 + $0x5a8] sm:$0xff]
        %v1756 = vld [vmem:[%s7 + $0x5b0] sm:$0xff]
        %v1757 = vld [vmem:[%s7 + $0x5b8] sm:$0xff]
        %v1758 = vld [vmem:[%s7 + $0x5c0] sm:$0xff]
        %v1759 = vld [vmem:[%s7 + $0x5c8] sm:$0xff]
        %v1760 = vld [vmem:[%s7 + $0x5d0] sm:$0xff]
        %v1761 = vld [vmem:[%s7 + $0x5d8] sm:$0xff]
        %v1762 = vld [vmem:[%s7 + $0x5e0] sm:$0xff]
        %v1763 = vld [vmem:[%s7 + $0x5e8] sm:$0xff]
        %v1764 = vld [vmem:[%s7 + $0x5f0] sm:$0xff]
        %v1765 = vld [vmem:[%s7 + $0x5f8] sm:$0xff]
        %v1766 = vld [vmem:[%s7 + $0x600] sm:$0xff]
        %v1767 = vld [vmem:[%s7 + $0x608] sm:$0xff]
        %v1768 = vld [vmem:[%s7 + $0x610] sm:$0xff]
        %v1769 = vld [vmem:[%s7 + $0x618] sm:$0xff]
        %v1770 = vld [vmem:[%s7 + $0x620] sm:$0xff]
        %v1771 = vld [vmem:[%s7 + $0x628] sm:$0xff]
        %v1772 = vld [vmem:[%s7 + $0x630] sm:$0xff]
        %v1773 = vld [vmem:[%s7 + $0x638] sm:$0xff]
        %v1774 = vld [vmem:[%s7 + $0x640] sm:$0xff]
        %v1775 = vld [vmem:[%s7 + $0x648] sm:$0xff]
        %v1776 = vld [vmem:[%s7 + $0x650] sm:$0xff]
        %v1777 = vld [vmem:[%s7 + $0x658] sm:$0xff]
        %v1778 = vld [vmem:[%s7 + $0x660] sm:$0xff]
        %v1779 = vld [vmem:[%s7 + $0x668] sm:$0xff]
        %v1780 = vld [vmem:[%s7 + $0x670] sm:$0xff]
        %v1781 = vld [vmem:[%s7 + $0x678] sm:$0xff]
        %v1782 = vld [vmem:[%s7 + $0x680] sm:$0xff]
        %v1783 = vld [vmem:[%s7 + $0x688] sm:$0xff]
        %v1784 = vld [vmem:[%s7 + $0x690] sm:$0xff]
        %v1785 = vld [vmem:[%s7 + $0x698] sm:$0xff]
        %v1786 = vld [vmem:[%s7 + $0x6a0] sm:$0xff]
        %v1787 = vld [vmem:[%s7 + $0x6a8] sm:$0xff]
        %v1788 = vld [vmem:[%s7 + $0x6b0] sm:$0xff]
        %v1789 = vld [vmem:[%s7 + $0x6b8] sm:$0xff]
        %v1790 = vld [vmem:[%s7 + $0x6c0] sm:$0xff]
        %v1791 = vld [vmem:[%s7 + $0x6c8] sm:$0xff]
        %v1792 = vld [vmem:[%s7 + $0x6d0] sm:$0xff]
        %v1793 = vld [vmem:[%s7 + $0x6d8] sm:$0xff]
        %v1794 = vld [vmem:[%s7 + $0x6e0] sm:$0xff]
        %v1795 = vld [vmem:[%s7 + $0x6e8] sm:$0xff]
        %v1796 = vld [vmem:[%s7 + $0x6f0] sm:$0xff]
        %v1797 = vld [vmem:[%s7 + $0x6f8] sm:$0xff]
        %v1798 = vld [vmem:[%s7 + $0x700] sm:$0xff]
        %v1799 = vld [vmem:[%s7 + $0x708] sm:$0xff]
        %v1800 = vld [vmem:[%s7 + $0x710] sm:$0xff]
        %v1801 = vld [vmem:[%s7 + $0x718] sm:$0xff]
        %v1802 = vld [vmem:[%s7 + $0x720] sm:$0xff]
        %v1803 = vld [vmem:[%s7 + $0x728] sm:$0xff]
        %v1804 = vld [vmem:[%s7 + $0x730] sm:$0xff]
        %v1805 = vld [vmem:[%s7 + $0x738] sm:$0xff]
        %v1806 = vld [vmem:[%s7 + $0x740] sm:$0xff]
        %v1807 = vld [vmem:[%s7 + $0x748] sm:$0xff]
        %v1808 = vld [vmem:[%s7 + $0x750] sm:$0xff]
        %v1809 = vld [vmem:[%s7 + $0x758] sm:$0xff]
        %v1810 = vld [vmem:[%s7 + $0x760] sm:$0xff]
        %v1811 = vld [vmem:[%s7 + $0x768] sm:$0xff]
        %v1812 = vld [vmem:[%s7 + $0x770] sm:$0xff]
        %v1813 = vld [vmem:[%s7 + $0x778] sm:$0xff]
        %v1814 = vld [vmem:[%s7 + $0x780] sm:$0xff]
        %v1815 = vld [vmem:[%s7 + $0x788] sm:$0xff]
        %v1816 = vld [vmem:[%s7 + $0x790] sm:$0xff]
        %v1817 = vld [vmem:[%s7 + $0x798] sm:$0xff]
        %v1818 = vld [vmem:[%s7 + $0x7a0] sm:$0xff]
        %v1819 = vld [vmem:[%s7 + $0x7a8] sm:$0xff]
        %v1820 = vld [vmem:[%s7 + $0x7b0] sm:$0xff]
        %v1821 = vld [vmem:[%s7 + $0x7b8] sm:$0xff]
        %v1822 = vld [vmem:[%s7 + $0x7c0] sm:$0xff]
        %v1823 = vld [vmem:[%s7 + $0x7c8] sm:$0xff]
        %v1824 = vld [vmem:[%s7 + $0x7d0] sm:$0xff]
        %v1825 = vld [vmem:[%s7 + $0x7d8] sm:$0xff]
        %v1826 = vld [vmem:[%s7 + $0x7e0] sm:$0xff]
        %v1827 = vld [vmem:[%s7 + $0x7e8] sm:$0xff]
        %v1828 = vld [vmem:[%s7 + $0x7f0] sm:$0xff]
        %v1829 = vld [vmem:[%s7 + $0x7f8] sm:$0xff]
        %v1830 = vld [vmem:[%s7 + $0x800] sm:$0xff]
        %v1831 = vld [vmem:[%s7 + $0x808] sm:$0xff]
        %v1832 = vld [vmem:[%s7 + $0x810] sm:$0xff]
        %v1833 = vld [vmem:[%s7 + $0x818] sm:$0xff]
        %v1834 = vld [vmem:[%s7 + $0x820] sm:$0xff]
        %v1835 = vld [vmem:[%s7 + $0x828] sm:$0xff]
        %v1836 = vld [vmem:[%s7 + $0x830] sm:$0xff]
        %v1837 = vld [vmem:[%s7 + $0x838] sm:$0xff]
        %v1838 = vld [vmem:[%s7 + $0x840] sm:$0xff]
        %v1839 = vld [vmem:[%s7 + $0x848] sm:$0xff]
        %v1840 = vld [vmem:[%s7 + $0x850] sm:$0xff]
        %v1841 = vld [vmem:[%s7 + $0x858] sm:$0xff]
        %v1842 = vld [vmem:[%s7 + $0x860] sm:$0xff]
        %v1843 = vld [vmem:[%s7 + $0x868] sm:$0xff]
        %v1844 = vld [vmem:[%s7 + $0x870] sm:$0xff]
        %v1845 = vld [vmem:[%s7 + $0x878] sm:$0xff]
        %v1846 = vld [vmem:[%s7 + $0x880] sm:$0xff]
        %v1847 = vld [vmem:[%s7 + $0x888] sm:$0xff]
        %v1848 = vld [vmem:[%s7 + $0x890] sm:$0xff]
        %v1849 = vld [vmem:[%s7 + $0x898] sm:$0xff]
        %v1850 = vld [vmem:[%s7 + $0x8a0] sm:$0xff]
        %v1851 = vld [vmem:[%s7 + $0x8a8] sm:$0xff]
        %v1852 = vld [vmem:[%s7 + $0x8b0] sm:$0xff]
        %v1853 = vld [vmem:[%s7 + $0x8b8] sm:$0xff]
        %v1854 = vld [vmem:[%s7 + $0x8c0] sm:$0xff]
        %v1855 = vld [vmem:[%s7 + $0x8c8] sm:$0xff]
        %v1856 = vld [vmem:[%s7 + $0x8d0] sm:$0xff]
        %v1857 = vld [vmem:[%s7 + $0x8d8] sm:$0xff]
        %v1858 = vld [vmem:[%s7 + $0x8e0] sm:$0xff]
        %v1859 = vld [vmem:[%s7 + $0x8e8] sm:$0xff]
        %v1860 = vld [vmem:[%s7 + $0x8f0] sm:$0xff]
        %v1861 = vld [vmem:[%s7 + $0x8f8] sm:$0xff]
        %v1862 = vld [vmem:[%s7 + $0x900] sm:$0xff]
        %v1863 = vld [vmem:[%s7 + $0x908] sm:$0xff]
        %v1864 = vld [vmem:[%s7 + $0x910] sm:$0xff]
        %v1865 = vld [vmem:[%s7 + $0x918] sm:$0xff]
        %v1866 = vld [vmem:[%s7 + $0x920] sm:$0xff]
        %v1867 = vld [vmem:[%s7 + $0x928] sm:$0xff]
        %v1868 = vld [vmem:[%s7 + $0x930] sm:$0xff]
        %v1869 = vld [vmem:[%s7 + $0x938] sm:$0xff]
        %v1870 = vld [vmem:[%s7 + $0x940] sm:$0xff]
        %v1871 = vld [vmem:[%s7 + $0x948] sm:$0xff]
        %v1872 = vld [vmem:[%s7 + $0x950] sm:$0xff]
        %v1873 = vld [vmem:[%s7 + $0x958] sm:$0xff]
        %v1874 = vld [vmem:[%s7 + $0x960] sm:$0xff]
        %v1875 = vld [vmem:[%s7 + $0x968] sm:$0xff]
        %v1876 = vld [vmem:[%s7 + $0x970] sm:$0xff]
        %v1877 = vld [vmem:[%s7 + $0x978] sm:$0xff]
        %v1878 = vld [vmem:[%s7 + $0x980] sm:$0xff]
        %v1879 = vld [vmem:[%s7 + $0x988] sm:$0xff]
        %v1880 = vld [vmem:[%s7 + $0x990] sm:$0xff]
        %v1881 = vld [vmem:[%s7 + $0x998] sm:$0xff]
        %v1882 = vld [vmem:[%s7 + $0x9a0] sm:$0xff]
        %v1883 = vld [vmem:[%s7 + $0x9a8] sm:$0xff]
        %v1884 = vld [vmem:[%s7 + $0x9b0] sm:$0xff]
        %v1885 = vld [vmem:[%s7 + $0x9b8] sm:$0xff]
        %v1886 = vld [vmem:[%s7 + $0x9c0] sm:$0xff]
        %v1887 = vld [vmem:[%s7 + $0x9c8] sm:$0xff]
        %v1888 = vld [vmem:[%s7 + $0x9d0] sm:$0xff]
        %v1889 = vld [vmem:[%s7 + $0x9d8] sm:$0xff]
        %v1890 = vld [vmem:[%s7 + $0x9e0] sm:$0xff]
        %v1891 = vld [vmem:[%s7 + $0x9e8] sm:$0xff]
        %v1892 = vld [vmem:[%s7 + $0x9f0] sm:$0xff]
        %v1893 = vld [vmem:[%s7 + $0x9f8] sm:$0xff]
        %v1894 = vld [vmem:[%s7 + $0xa00] sm:$0xff]
        %v1895 = vld [vmem:[%s7 + $0xa08] sm:$0xff]
        %v1896 = vld [vmem:[%s7 + $0xa10] sm:$0xff]
        %v1897 = vld [vmem:[%s7 + $0xa18] sm:$0xff]
        %v1898 = vld [vmem:[%s7 + $0xa20] sm:$0xff]
        %v1899 = vld [vmem:[%s7 + $0xa28] sm:$0xff]
        %v1900 = vld [vmem:[%s7 + $0xa30] sm:$0xff]
        %v1901 = vld [vmem:[%s7 + $0xa38] sm:$0xff]
        %v1902 = vld [vmem:[%s7 + $0xa40] sm:$0xff]
        %v1903 = vld [vmem:[%s7 + $0xa48] sm:$0xff]
        %v1904 = vld [vmem:[%s7 + $0xa50] sm:$0xff]
        %v1905 = vld [vmem:[%s7 + $0xa58] sm:$0xff]
        %v1906 = vld [vmem:[%s7 + $0xa60] sm:$0xff]
        %v1907 = vld [vmem:[%s7 + $0xa68] sm:$0xff]
        %v1908 = vld [vmem:[%s7 + $0xa70] sm:$0xff]
        %v1909 = vld [vmem:[%s7 + $0xa78] sm:$0xff]
        %v1910 = vld [vmem:[%s7 + $0xa80] sm:$0xff]
        %v1911 = vld [vmem:[%s7 + $0xa88] sm:$0xff]
        %v1912 = vld [vmem:[%s7 + $0xa90] sm:$0xff]
        %v1913 = vld [vmem:[%s7 + $0xa98] sm:$0xff]
        %v1914 = vld [vmem:[%s7 + $0xaa0] sm:$0xff]
        %v1915 = vld [vmem:[%s7 + $0xaa8] sm:$0xff]
        %v1916 = vld [vmem:[%s7 + $0xab0] sm:$0xff]
        %v1917 = vld [vmem:[%s7 + $0xab8] sm:$0xff]
        %v1918 = vld [vmem:[%s7 + $0xac0] sm:$0xff]
        %v1919 = vld [vmem:[%s7 + $0xac8] sm:$0xff]
        %v1920 = vld [vmem:[%s7 + $0xad0] sm:$0xff]
        %v1921 = vld [vmem:[%s7 + $0xad8] sm:$0xff]
        %v1922 = vld [vmem:[%s7 + $0xae0] sm:$0xff]
        %v1923 = vld [vmem:[%s7 + $0xae8] sm:$0xff]
        %v1924 = vld [vmem:[%s7 + $0xaf0] sm:$0xff]
        %v1925 = vld [vmem:[%s7 + $0xaf8] sm:$0xff]
        %v1926 = vld [vmem:[%s7 + $0xb00] sm:$0xff]
        %v1927 = vld [vmem:[%s7 + $0xb08] sm:$0xff]
        %v1928 = vld [vmem:[%s7 + $0xb10] sm:$0xff]
        %v1929 = vld [vmem:[%s7 + $0xb18] sm:$0xff]
        %v1930 = vld [vmem:[%s7 + $0xb20] sm:$0xff]
        %v1931 = vld [vmem:[%s7 + $0xb28] sm:$0xff]
        %v1932 = vld [vmem:[%s7 + $0xb30] sm:$0xff]
        %v1933 = vld [vmem:[%s7 + $0xb38] sm:$0xff]
        %v1934 = vld [vmem:[%s7 + $0xb40] sm:$0xff]
        %v1935 = vld [vmem:[%s7 + $0xb48] sm:$0xff]
        %v1936 = vld [vmem:[%s7 + $0xb50] sm:$0xff]
        %v1937 = vld [vmem:[%s7 + $0xb58] sm:$0xff]
        %v1938 = vld [vmem:[%s7 + $0xb60] sm:$0xff]
        %v1939 = vld [vmem:[%s7 + $0xb68] sm:$0xff]
        %v1940 = vld [vmem:[%s7 + $0xb70] sm:$0xff]
        %v1941 = vld [vmem:[%s7 + $0xb78] sm:$0xff]
        %v1942 = vld [vmem:[%s7 + $0xb80] sm:$0xff]
        %v1943 = vld [vmem:[%s7 + $0xb88] sm:$0xff]
        %v1944 = vld [vmem:[%s7 + $0xb90] sm:$0xff]
        %v1945 = vld [vmem:[%s7 + $0xb98] sm:$0xff]
        %v1946 = vld [vmem:[%s7 + $0xba0] sm:$0xff]
        %v1947 = vld [vmem:[%s7 + $0xba8] sm:$0xff]
        %v1948 = vld [vmem:[%s7 + $0xbb0] sm:$0xff]
        %v1949 = vld [vmem:[%s7 + $0xbb8] sm:$0xff]
        %v1950 = vld [vmem:[%s7 + $0xbc0] sm:$0xff]
        %v1951 = vld [vmem:[%s7 + $0xbc8] sm:$0xff]
        %v1952 = vld [vmem:[%s7 + $0xbd0] sm:$0xff]
        %v1953 = vld [vmem:[%s7 + $0xbd8] sm:$0xff]
        %v1954 = vld [vmem:[%s7 + $0xbe0] sm:$0xff]
        %v1955 = vld [vmem:[%s7 + $0xbe8] sm:$0xff]
        %v1956 = vld [vmem:[%s7 + $0xbf0] sm:$0xff]
        %v1957 = vld [vmem:[%s7 + $0xbf8] sm:$0xff]
        %v1958 = vld [vmem:[%s7 + $0xc00] sm:$0xff]
        %v1959 = vld [vmem:[%s7 + $0xc08] sm:$0xff]
        %v1960 = vld [vmem:[%s7 + $0xc10] sm:$0xff]
        %v1961 = vld [vmem:[%s7 + $0xc18] sm:$0xff]
        %v1962 = vld [vmem:[%s7 + $0xc20] sm:$0xff]
        %v1963 = vld [vmem:[%s7 + $0xc28] sm:$0xff]
        %v1964 = vld [vmem:[%s7 + $0xc30] sm:$0xff]
        %v1965 = vld [vmem:[%s7 + $0xc38] sm:$0xff]
        %v1966 = vld [vmem:[%s7 + $0xc40] sm:$0xff]
        %v1967 = vld [vmem:[%s7 + $0xc48] sm:$0xff]
        %v1968 = vld [vmem:[%s7 + $0xc50] sm:$0xff]
        %v1969 = vld [vmem:[%s7 + $0xc58] sm:$0xff]
        %v1970 = vld [vmem:[%s7 + $0xc60] sm:$0xff]
        %v1971 = vld [vmem:[%s7 + $0xc68] sm:$0xff]
        %v1972 = vld [vmem:[%s7 + $0xc70] sm:$0xff]
        %v1973 = vld [vmem:[%s7 + $0xc78] sm:$0xff]
        %v1974 = vld [vmem:[%s7 + $0xc80] sm:$0xff]
        %v1975 = vld [vmem:[%s7 + $0xc88] sm:$0xff]
        %v1976 = vld [vmem:[%s7 + $0xc90] sm:$0xff]
        %v1977 = vld [vmem:[%s7 + $0xc98] sm:$0xff]
        %v1978 = vld [vmem:[%s7 + $0xca0] sm:$0xff]
        %v1979 = vld [vmem:[%s7 + $0xca8] sm:$0xff]
        %v1980 = vld [vmem:[%s7 + $0xcb0] sm:$0xff]
        %v1981 = vld [vmem:[%s7 + $0xcb8] sm:$0xff]
        %v1982 = vld [vmem:[%s7 + $0xcc0] sm:$0xff]
        %v1983 = vld [vmem:[%s7 + $0xcc8] sm:$0xff]
        %v1984 = vld [vmem:[%s7 + $0xcd0] sm:$0xff]
        %v1985 = vld [vmem:[%s7 + $0xcd8] sm:$0xff]
        %v1986 = vld [vmem:[%s7 + $0xce0] sm:$0xff]
        %v1987 = vld [vmem:[%s7 + $0xce8] sm:$0xff]
        %v1988 = vld [vmem:[%s7 + $0xcf0] sm:$0xff]
        %v1989 = vld [vmem:[%s7 + $0xcf8] sm:$0xff]
        %v1990 = vld [vmem:[%s7 + $0xd00] sm:$0xff]
        %v1991 = vld [vmem:[%s7 + $0xd08] sm:$0xff]
        %v1992 = vld [vmem:[%s7 + $0xd10] sm:$0xff]
        %v1993 = vld [vmem:[%s7 + $0xd18] sm:$0xff]
        %v1994 = vld [vmem:[%s7 + $0xd20] sm:$0xff]
        %v1995 = vld [vmem:[%s7 + $0xd28] sm:$0xff]
        %v1996 = vld [vmem:[%s7 + $0xd30] sm:$0xff]
        %v1997 = vld [vmem:[%s7 + $0xd38] sm:$0xff]
        %v1998 = vld [vmem:[%s7 + $0xd40] sm:$0xff]
        %v1999 = vld [vmem:[%s7 + $0xd48] sm:$0xff]
        %v2000 = vld [vmem:[%s7 + $0xd50] sm:$0xff]
        %v2001 = vld [vmem:[%s7 + $0xd58] sm:$0xff]
        %v2002 = vld [vmem:[%s7 + $0xd60] sm:$0xff]
        %v2003 = vld [vmem:[%s7 + $0xd68] sm:$0xff]
        %v2004 = vld [vmem:[%s7 + $0xd70] sm:$0xff]
        %v2005 = vld [vmem:[%s7 + $0xd78] sm:$0xff]
        %v2006 = vld [vmem:[%s7 + $0xd80] sm:$0xff]
        %v2007 = vld [vmem:[%s7 + $0xd88] sm:$0xff]
        %v2008 = vld [vmem:[%s7 + $0xd90] sm:$0xff]
        %v2009 = vld [vmem:[%s7 + $0xd98] sm:$0xff]
        %v2010 = vld [vmem:[%s7 + $0xda0] sm:$0xff]
        %v2011 = vld [vmem:[%s7 + $0xda8] sm:$0xff]
        %v2012 = vld [vmem:[%s7 + $0xdb0] sm:$0xff]
        %v2013 = vld [vmem:[%s7 + $0xdb8] sm:$0xff]
        %v2014 = vld [vmem:[%s7 + $0xdc0] sm:$0xff]
        %v2015 = vld [vmem:[%s7 + $0xdc8] sm:$0xff]
        %v2016 = vld [vmem:[%s7 + $0xdd0] sm:$0xff]
        %v2017 = vld [vmem:[%s7 + $0xdd8] sm:$0xff]
        %v2018 = vld [vmem:[%s7 + $0xde0] sm:$0xff]
        %v2019 = vld [vmem:[%s7 + $0xde8] sm:$0xff]
        %v2020 = vld [vmem:[%s7 + $0xdf0] sm:$0xff]
        %v2021 = vld [vmem:[%s7 + $0xdf8] sm:$0xff]
        %v2022 = vld [vmem:[%s8] sm:$0x7f]
        %v2024 = vperm.slane %v2022, 0
        %v2025 = vperm.slane %v2022, 1
        %v2026 = vperm.slane %v2022, 2
        %v2027 = vperm.slane %v2022, 3
        %v2028 = vperm.slane %v2022, 4
        %v2029 = vperm.slane %v2022, 5
        %v2030 = vperm.slane %v2022, 6
        %2038 = vmatpush.msra.mxu0 %v1679
        %2039 = vmatpush.msra.mxu0 %v1672
        %2040 = vmatpush.msra.mxu0 %v1665
        %2041 = vmatpush.msra.mxu0 %v1658
        %2042 = vmatpush.msra.mxu0 %v1651
        %2043 = vmatpush.msra.mxu0 %v1644
        %2044 = vmatpush.msra.mxu0 %v1637
        %2045 = vmatpush.msra.mxu0 %v1630
        %2046 = vmatpush.msra.mxu0 %v1623
        %2047 = vmatpush.msra.mxu0 %v1616
        %2048 = vmatpush.msra.mxu0 %v1609
        %2049 = vmatpush.msra.mxu0 %v1602
        %2050 = vmatpush.msra.mxu0 %v1595
        %2051 = vmatpush.msra.mxu0 %v1588
        %2052 = vmatpush.msra.mxu0 %v1581
        %2053 = vmatpush.msra.mxu0 %v1574
        %2054 = vmatmul.f32.gmra.mxu0 %v1570
        %v2055 = vpop.f32.mrf.mxu0
        %v2056 = vadd.f32 %v2024, %v2055
        %2057 = vdwg.mxu0
        %2058 = vmatpush.msra.mxu0 %v1791
        %2059 = vmatpush.msra.mxu0 %v1784
        %2060 = vmatpush.msra.mxu0 %v1777
        %2061 = vmatpush.msra.mxu0 %v1770
        %2062 = vmatpush.msra.mxu0 %v1763
        %2063 = vmatpush.msra.mxu0 %v1756
        %2064 = vmatpush.msra.mxu0 %v1749
        %2065 = vmatpush.msra.mxu0 %v1742
        %2066 = vmatpush.msra.mxu0 %v1735
        %2067 = vmatpush.msra.mxu0 %v1728
        %2068 = vmatpush.msra.mxu0 %v1721
        %2069 = vmatpush.msra.mxu0 %v1714
        %2070 = vmatpush.msra.mxu0 %v1707
        %2071 = vmatpush.msra.mxu0 %v1700
        %2072 = vmatpush.msra.mxu0 %v1693
        %2073 = vmatpush.msra.mxu0 %v1686
        %2074 = vmatmul.f32.gmra.mxu0 %v1571
        %v2075 = vpop.f32.mrf.mxu0
        %v2076 = vadd.f32 %v2056, %v2075
        %2077 = vdwg.mxu0
        %2078 = vmatpush.msra.mxu0 %v1903
        %2079 = vmatpush.msra.mxu0 %v1896
        %2080 = vmatpush.msra.mxu0 %v1889
        %2081 = vmatpush.msra.mxu0 %v1882
        %2082 = vmatpush.msra.mxu0 %v1875
        %2083 = vmatpush.msra.mxu0 %v1868
        %2084 = vmatpush.msra.mxu0 %v1861
        %2085 = vmatpush.msra.mxu0 %v1854
        %2086 = vmatpush.msra.mxu0 %v1847
        %2087 = vmatpush.msra.mxu0 %v1840
        %2088 = vmatpush.msra.mxu0 %v1833
        %2089 = vmatpush.msra.mxu0 %v1826
        %2090 = vmatpush.msra.mxu0 %v1819
        %2091 = vmatpush.msra.mxu0 %v1812
        %2092 = vmatpush.msra.mxu0 %v1805
        %2093 = vmatpush.msra.mxu0 %v1798
        %2094 = vmatmul.f32.gmra.mxu0 %v1572
        %v2095 = vpop.f32.mrf.mxu0
        %v2096 = vadd.f32 %v2076, %v2095
        %2097 = vdwg.mxu0
        %2098 = vmatpush.msra.mxu0 %v2015
        %2099 = vmatpush.msra.mxu0 %v2008
        %2100 = vmatpush.msra.mxu0 %v2001
        %2101 = vmatpush.msra.mxu0 %v1994
        %2102 = vmatpush.msra.mxu0 %v1987
        %2103 = vmatpush.msra.mxu0 %v1980
        %2104 = vmatpush.msra.mxu0 %v1973
        %2105 = vmatpush.msra.mxu0 %v1966
        %2106 = vmatpush.msra.mxu0 %v1959
        %2107 = vmatpush.msra.mxu0 %v1952
        %2108 = vmatpush.msra.mxu0 %v1945
        %2109 = vmatpush.msra.mxu0 %v1938
        %2110 = vmatpush.msra.mxu0 %v1931
        %2111 = vmatpush.msra.mxu0 %v1924
        %2112 = vmatpush.msra.mxu0 %v1917
        %2113 = vmatpush.msra.mxu0 %v1910
        %2114 = vmatmul.f32.gmra.mxu0 %v1573
        %v2115 = vpop.f32.mrf.mxu0
        %v2116 = vadd.f32 %v2096, %v2115
        %2117 = vdwg.mxu0
        %2118 = vmatpush.msra.mxu0 %v1680
        %2119 = vmatpush.msra.mxu0 %v1673
        %2120 = vmatpush.msra.mxu0 %v1666
        %2121 = vmatpush.msra.mxu0 %v1659
        %2122 = vmatpush.msra.mxu0 %v1652
        %2123 = vmatpush.msra.mxu0 %v1645
        %2124 = vmatpush.msra.mxu0 %v1638
        %2125 = vmatpush.msra.mxu0 %v1631
        %2126 = vmatpush.msra.mxu0 %v1624
        %2127 = vmatpush.msra.mxu0 %v1617
        %2128 = vmatpush.msra.mxu0 %v1610
        %2129 = vmatpush.msra.mxu0 %v1603
        %2130 = vmatpush.msra.mxu0 %v1596
        %2131 = vmatpush.msra.mxu0 %v1589
        %2132 = vmatpush.msra.mxu0 %v1582
        %2133 = vmatpush.msra.mxu0 %v1575
        %2134 = vmatmul.f32.gmra.mxu0 %v1570
        %v2135 = vpop.f32.mrf.mxu0
        %v2136 = vadd.f32 %v2025, %v2135
        %2137 = vdwg.mxu0
        %2138 = vmatpush.msra.mxu0 %v1792
        %2139 = vmatpush.msra.mxu0 %v1785
        %2140 = vmatpush.msra.mxu0 %v1778
        %2141 = vmatpush.msra.mxu0 %v1771
        %2142 = vmatpush.msra.mxu0 %v1764
        %2143 = vmatpush.msra.mxu0 %v1757
        %2144 = vmatpush.msra.mxu0 %v1750
        %2145 = vmatpush.msra.mxu0 %v1743
        %2146 = vmatpush.msra.mxu0 %v1736
        %2147 = vmatpush.msra.mxu0 %v1729
        %2148 = vmatpush.msra.mxu0 %v1722
        %2149 = vmatpush.msra.mxu0 %v1715
        %2150 = vmatpush.msra.mxu0 %v1708
        %2151 = vmatpush.msra.mxu0 %v1701
        %2152 = vmatpush.msra.mxu0 %v1694
        %2153 = vmatpush.msra.mxu0 %v1687
        %2154 = vmatmul.f32.gmra.mxu0 %v1571
        %v2155 = vpop.f32.mrf.mxu0
        %v2156 = vadd.f32 %v2136, %v2155
        %2157 = vdwg.mxu0
        %2158 = vmatpush.msra.mxu0 %v1904
        %2159 = vmatpush.msra.mxu0 %v1897
        %2160 = vmatpush.msra.mxu0 %v1890
        %2161 = vmatpush.msra.mxu0 %v1883
        %2162 = vmatpush.msra.mxu0 %v1876
        %2163 = vmatpush.msra.mxu0 %v1869
        %2164 = vmatpush.msra.mxu0 %v1862
        %2165 = vmatpush.msra.mxu0 %v1855
        %2166 = vmatpush.msra.mxu0 %v1848
        %2167 = vmatpush.msra.mxu0 %v1841
        %2168 = vmatpush.msra.mxu0 %v1834
        %2169 = vmatpush.msra.mxu0 %v1827
        %2170 = vmatpush.msra.mxu0 %v1820
        %2171 = vmatpush.msra.mxu0 %v1813
        %2172 = vmatpush.msra.mxu0 %v1806
        %2173 = vmatpush.msra.mxu0 %v1799
        %2174 = vmatmul.f32.gmra.mxu0 %v1572
        %v2175 = vpop.f32.mrf.mxu0
        %v2176 = vadd.f32 %v2156, %v2175
        %2177 = vdwg.mxu0
        %2178 = vmatpush.msra.mxu0 %v2016
        %2179 = vmatpush.msra.mxu0 %v2009
        %2180 = vmatpush.msra.mxu0 %v2002
        %2181 = vmatpush.msra.mxu0 %v1995
        %2182 = vmatpush.msra.mxu0 %v1988
        %2183 = vmatpush.msra.mxu0 %v1981
        %2184 = vmatpush.msra.mxu0 %v1974
        %2185 = vmatpush.msra.mxu0 %v1967
        %2186 = vmatpush.msra.mxu0 %v1960
        %2187 = vmatpush.msra.mxu0 %v1953
        %2188 = vmatpush.msra.mxu0 %v1946
        %2189 = vmatpush.msra.mxu0 %v1939
        %2190 = vmatpush.msra.mxu0 %v1932
        %2191 = vmatpush.msra.mxu0 %v1925
        %2192 = vmatpush.msra.mxu0 %v1918
        %2193 = vmatpush.msra.mxu0 %v1911
        %2194 = vmatmul.f32.gmra.mxu0 %v1573
        %v2195 = vpop.f32.mrf.mxu0
        %v2196 = vadd.f32 %v2176, %v2195
        %2197 = vdwg.mxu0
        %2198 = vmatpush.msra.mxu0 %v1681
        %2199 = vmatpush.msra.mxu0 %v1674
        %2200 = vmatpush.msra.mxu0 %v1667
        %2201 = vmatpush.msra.mxu0 %v1660
        %2202 = vmatpush.msra.mxu0 %v1653
        %2203 = vmatpush.msra.mxu0 %v1646
        %2204 = vmatpush.msra.mxu0 %v1639
        %2205 = vmatpush.msra.mxu0 %v1632
        %2206 = vmatpush.msra.mxu0 %v1625
        %2207 = vmatpush.msra.mxu0 %v1618
        %2208 = vmatpush.msra.mxu0 %v1611
        %2209 = vmatpush.msra.mxu0 %v1604
        %2210 = vmatpush.msra.mxu0 %v1597
        %2211 = vmatpush.msra.mxu0 %v1590
        %2212 = vmatpush.msra.mxu0 %v1583
        %2213 = vmatpush.msra.mxu0 %v1576
        %2214 = vmatmul.f32.gmra.mxu0 %v1570
        %v2215 = vpop.f32.mrf.mxu0
        %v2216 = vadd.f32 %v2026, %v2215
        %2217 = vdwg.mxu0
        %2218 = vmatpush.msra.mxu0 %v1793
        %2219 = vmatpush.msra.mxu0 %v1786
        %2220 = vmatpush.msra.mxu0 %v1779
        %2221 = vmatpush.msra.mxu0 %v1772
        %2222 = vmatpush.msra.mxu0 %v1765
        %2223 = vmatpush.msra.mxu0 %v1758
        %2224 = vmatpush.msra.mxu0 %v1751
        %2225 = vmatpush.msra.mxu0 %v1744
        %2226 = vmatpush.msra.mxu0 %v1737
        %2227 = vmatpush.msra.mxu0 %v1730
        %2228 = vmatpush.msra.mxu0 %v1723
        %2229 = vmatpush.msra.mxu0 %v1716
        %2230 = vmatpush.msra.mxu0 %v1709
        %2231 = vmatpush.msra.mxu0 %v1702
        %2232 = vmatpush.msra.mxu0 %v1695
        %2233 = vmatpush.msra.mxu0 %v1688
        %2234 = vmatmul.f32.gmra.mxu0 %v1571
        %v2235 = vpop.f32.mrf.mxu0
        %v2236 = vadd.f32 %v2216, %v2235
        %2237 = vdwg.mxu0
        %2238 = vmatpush.msra.mxu0 %v1905
        %2239 = vmatpush.msra.mxu0 %v1898
        %2240 = vmatpush.msra.mxu0 %v1891
        %2241 = vmatpush.msra.mxu0 %v1884
        %2242 = vmatpush.msra.mxu0 %v1877
        %2243 = vmatpush.msra.mxu0 %v1870
        %2244 = vmatpush.msra.mxu0 %v1863
        %2245 = vmatpush.msra.mxu0 %v1856
        %2246 = vmatpush.msra.mxu0 %v1849
        %2247 = vmatpush.msra.mxu0 %v1842
        %2248 = vmatpush.msra.mxu0 %v1835
        %2249 = vmatpush.msra.mxu0 %v1828
        %2250 = vmatpush.msra.mxu0 %v1821
        %2251 = vmatpush.msra.mxu0 %v1814
        %2252 = vmatpush.msra.mxu0 %v1807
        %2253 = vmatpush.msra.mxu0 %v1800
        %2254 = vmatmul.f32.gmra.mxu0 %v1572
        %v2255 = vpop.f32.mrf.mxu0
        %v2256 = vadd.f32 %v2236, %v2255
        %2257 = vdwg.mxu0
        %2258 = vmatpush.msra.mxu0 %v2017
        %2259 = vmatpush.msra.mxu0 %v2010
        %2260 = vmatpush.msra.mxu0 %v2003
        %2261 = vmatpush.msra.mxu0 %v1996
        %2262 = vmatpush.msra.mxu0 %v1989
        %2263 = vmatpush.msra.mxu0 %v1982
        %2264 = vmatpush.msra.mxu0 %v1975
        %2265 = vmatpush.msra.mxu0 %v1968
        %2266 = vmatpush.msra.mxu0 %v1961
        %2267 = vmatpush.msra.mxu0 %v1954
        %2268 = vmatpush.msra.mxu0 %v1947
        %2269 = vmatpush.msra.mxu0 %v1940
        %2270 = vmatpush.msra.mxu0 %v1933
        %2271 = vmatpush.msra.mxu0 %v1926
        %2272 = vmatpush.msra.mxu0 %v1919
        %2273 = vmatpush.msra.mxu0 %v1912
        %2274 = vmatmul.f32.gmra.mxu0 %v1573
        %v2275 = vpop.f32.mrf.mxu0
        %v2276 = vadd.f32 %v2256, %v2275
        %2277 = vdwg.mxu0
        %2278 = vmatpush.msra.mxu0 %v1682
        %2279 = vmatpush.msra.mxu0 %v1675
        %2280 = vmatpush.msra.mxu0 %v1668
        %2281 = vmatpush.msra.mxu0 %v1661
        %2282 = vmatpush.msra.mxu0 %v1654
        %2283 = vmatpush.msra.mxu0 %v1647
        %2284 = vmatpush.msra.mxu0 %v1640
        %2285 = vmatpush.msra.mxu0 %v1633
        %2286 = vmatpush.msra.mxu0 %v1626
        %2287 = vmatpush.msra.mxu0 %v1619
        %2288 = vmatpush.msra.mxu0 %v1612
        %2289 = vmatpush.msra.mxu0 %v1605
        %2290 = vmatpush.msra.mxu0 %v1598
        %2291 = vmatpush.msra.mxu0 %v1591
        %2292 = vmatpush.msra.mxu0 %v1584
        %2293 = vmatpush.msra.mxu0 %v1577
        %2294 = vmatmul.f32.gmra.mxu0 %v1570
        %v2295 = vpop.f32.mrf.mxu0
        %v2296 = vadd.f32 %v2027, %v2295
        %2297 = vdwg.mxu0
        %2298 = vmatpush.msra.mxu0 %v1794
        %2299 = vmatpush.msra.mxu0 %v1787
        %2300 = vmatpush.msra.mxu0 %v1780
        %2301 = vmatpush.msra.mxu0 %v1773
        %2302 = vmatpush.msra.mxu0 %v1766
        %2303 = vmatpush.msra.mxu0 %v1759
        %2304 = vmatpush.msra.mxu0 %v1752
        %2305 = vmatpush.msra.mxu0 %v1745
        %2306 = vmatpush.msra.mxu0 %v1738
        %2307 = vmatpush.msra.mxu0 %v1731
        %2308 = vmatpush.msra.mxu0 %v1724
        %2309 = vmatpush.msra.mxu0 %v1717
        %2310 = vmatpush.msra.mxu0 %v1710
        %2311 = vmatpush.msra.mxu0 %v1703
        %2312 = vmatpush.msra.mxu0 %v1696
        %2313 = vmatpush.msra.mxu0 %v1689
        %2314 = vmatmul.f32.gmra.mxu0 %v1571
        %v2315 = vpop.f32.mrf.mxu0
        %v2316 = vadd.f32 %v2296, %v2315
        %2317 = vdwg.mxu0
        %2318 = vmatpush.msra.mxu0 %v1906
        %2319 = vmatpush.msra.mxu0 %v1899
        %2320 = vmatpush.msra.mxu0 %v1892
        %2321 = vmatpush.msra.mxu0 %v1885
        %2322 = vmatpush.msra.mxu0 %v1878
        %2323 = vmatpush.msra.mxu0 %v1871
        %2324 = vmatpush.msra.mxu0 %v1864
        %2325 = vmatpush.msra.mxu0 %v1857
        %2326 = vmatpush.msra.mxu0 %v1850
        %2327 = vmatpush.msra.mxu0 %v1843
        %2328 = vmatpush.msra.mxu0 %v1836
        %2329 = vmatpush.msra.mxu0 %v1829
        %2330 = vmatpush.msra.mxu0 %v1822
        %2331 = vmatpush.msra.mxu0 %v1815
        %2332 = vmatpush.msra.mxu0 %v1808
        %2333 = vmatpush.msra.mxu0 %v1801
        %2334 = vmatmul.f32.gmra.mxu0 %v1572
        %v2335 = vpop.f32.mrf.mxu0
        %v2336 = vadd.f32 %v2316, %v2335
        %2337 = vdwg.mxu0
        %2338 = vmatpush.msra.mxu0 %v2018
        %2339 = vmatpush.msra.mxu0 %v2011
        %2340 = vmatpush.msra.mxu0 %v2004
        %2341 = vmatpush.msra.mxu0 %v1997
        %2342 = vmatpush.msra.mxu0 %v1990
        %2343 = vmatpush.msra.mxu0 %v1983
        %2344 = vmatpush.msra.mxu0 %v1976
        %2345 = vmatpush.msra.mxu0 %v1969
        %2346 = vmatpush.msra.mxu0 %v1962
        %2347 = vmatpush.msra.mxu0 %v1955
        %2348 = vmatpush.msra.mxu0 %v1948
        %2349 = vmatpush.msra.mxu0 %v1941
        %2350 = vmatpush.msra.mxu0 %v1934
        %2351 = vmatpush.msra.mxu0 %v1927
        %2352 = vmatpush.msra.mxu0 %v1920
        %2353 = vmatpush.msra.mxu0 %v1913
        %2354 = vmatmul.f32.gmra.mxu0 %v1573
        %v2355 = vpop.f32.mrf.mxu0
        %v2356 = vadd.f32 %v2336, %v2355
        %2357 = vdwg.mxu0
        %2358 = vmatpush.msra.mxu0 %v1683
        %2359 = vmatpush.msra.mxu0 %v1676
        %2360 = vmatpush.msra.mxu0 %v1669
        %2361 = vmatpush.msra.mxu0 %v1662
        %2362 = vmatpush.msra.mxu0 %v1655
        %2363 = vmatpush.msra.mxu0 %v1648
        %2364 = vmatpush.msra.mxu0 %v1641
        %2365 = vmatpush.msra.mxu0 %v1634
        %2366 = vmatpush.msra.mxu0 %v1627
        %2367 = vmatpush.msra.mxu0 %v1620
        %2368 = vmatpush.msra.mxu0 %v1613
        %2369 = vmatpush.msra.mxu0 %v1606
        %2370 = vmatpush.msra.mxu0 %v1599
        %2371 = vmatpush.msra.mxu0 %v1592
        %2372 = vmatpush.msra.mxu0 %v1585
        %2373 = vmatpush.msra.mxu0 %v1578
        %2374 = vmatmul.f32.gmra.mxu0 %v1570
        %v2375 = vpop.f32.mrf.mxu0
        %v2376 = vadd.f32 %v2028, %v2375
        %2377 = vdwg.mxu0
        %2378 = vmatpush.msra.mxu0 %v1795
        %2379 = vmatpush.msra.mxu0 %v1788
        %2380 = vmatpush.msra.mxu0 %v1781
        %2381 = vmatpush.msra.mxu0 %v1774
        %2382 = vmatpush.msra.mxu0 %v1767
        %2383 = vmatpush.msra.mxu0 %v1760
        %2384 = vmatpush.msra.mxu0 %v1753
        %2385 = vmatpush.msra.mxu0 %v1746
        %2386 = vmatpush.msra.mxu0 %v1739
        %2387 = vmatpush.msra.mxu0 %v1732
        %2388 = vmatpush.msra.mxu0 %v1725
        %2389 = vmatpush.msra.mxu0 %v1718
        %2390 = vmatpush.msra.mxu0 %v1711
        %2391 = vmatpush.msra.mxu0 %v1704
        %2392 = vmatpush.msra.mxu0 %v1697
        %2393 = vmatpush.msra.mxu0 %v1690
        %2394 = vmatmul.f32.gmra.mxu0 %v1571
        %v2395 = vpop.f32.mrf.mxu0
        %v2396 = vadd.f32 %v2376, %v2395
        %2397 = vdwg.mxu0
        %2398 = vmatpush.msra.mxu0 %v1907
        %2399 = vmatpush.msra.mxu0 %v1900
        %2400 = vmatpush.msra.mxu0 %v1893
        %2401 = vmatpush.msra.mxu0 %v1886
        %2402 = vmatpush.msra.mxu0 %v1879
        %2403 = vmatpush.msra.mxu0 %v1872
        %2404 = vmatpush.msra.mxu0 %v1865
        %2405 = vmatpush.msra.mxu0 %v1858
        %2406 = vmatpush.msra.mxu0 %v1851
        %2407 = vmatpush.msra.mxu0 %v1844
        %2408 = vmatpush.msra.mxu0 %v1837
        %2409 = vmatpush.msra.mxu0 %v1830
        %2410 = vmatpush.msra.mxu0 %v1823
        %2411 = vmatpush.msra.mxu0 %v1816
        %2412 = vmatpush.msra.mxu0 %v1809
        %2413 = vmatpush.msra.mxu0 %v1802
        %2414 = vmatmul.f32.gmra.mxu0 %v1572
        %v2415 = vpop.f32.mrf.mxu0
        %v2416 = vadd.f32 %v2396, %v2415
        %2417 = vdwg.mxu0
        %2418 = vmatpush.msra.mxu0 %v2019
        %2419 = vmatpush.msra.mxu0 %v2012
        %2420 = vmatpush.msra.mxu0 %v2005
        %2421 = vmatpush.msra.mxu0 %v1998
        %2422 = vmatpush.msra.mxu0 %v1991
        %2423 = vmatpush.msra.mxu0 %v1984
        %2424 = vmatpush.msra.mxu0 %v1977
        %2425 = vmatpush.msra.mxu0 %v1970
        %2426 = vmatpush.msra.mxu0 %v1963
        %2427 = vmatpush.msra.mxu0 %v1956
        %2428 = vmatpush.msra.mxu0 %v1949
        %2429 = vmatpush.msra.mxu0 %v1942
        %2430 = vmatpush.msra.mxu0 %v1935
        %2431 = vmatpush.msra.mxu0 %v1928
        %2432 = vmatpush.msra.mxu0 %v1921
        %2433 = vmatpush.msra.mxu0 %v1914
        %2434 = vmatmul.f32.gmra.mxu0 %v1573
        %v2435 = vpop.f32.mrf.mxu0
        %v2436 = vadd.f32 %v2416, %v2435
        %2437 = vdwg.mxu0
        %2438 = vmatpush.msra.mxu0 %v1684
        %2439 = vmatpush.msra.mxu0 %v1677
        %2440 = vmatpush.msra.mxu0 %v1670
        %2441 = vmatpush.msra.mxu0 %v1663
        %2442 = vmatpush.msra.mxu0 %v1656
        %2443 = vmatpush.msra.mxu0 %v1649
        %2444 = vmatpush.msra.mxu0 %v1642
        %2445 = vmatpush.msra.mxu0 %v1635
        %2446 = vmatpush.msra.mxu0 %v1628
        %2447 = vmatpush.msra.mxu0 %v1621
        %2448 = vmatpush.msra.mxu0 %v1614
        %2449 = vmatpush.msra.mxu0 %v1607
        %2450 = vmatpush.msra.mxu0 %v1600
        %2451 = vmatpush.msra.mxu0 %v1593
        %2452 = vmatpush.msra.mxu0 %v1586
        %2453 = vmatpush.msra.mxu0 %v1579
        %2454 = vmatmul.f32.gmra.mxu0 %v1570
        %v2455 = vpop.f32.mrf.mxu0
        %v2456 = vadd.f32 %v2029, %v2455
        %2457 = vdwg.mxu0
        %2458 = vmatpush.msra.mxu0 %v1796
        %2459 = vmatpush.msra.mxu0 %v1789
        %2460 = vmatpush.msra.mxu0 %v1782
        %2461 = vmatpush.msra.mxu0 %v1775
        %2462 = vmatpush.msra.mxu0 %v1768
        %2463 = vmatpush.msra.mxu0 %v1761
        %2464 = vmatpush.msra.mxu0 %v1754
        %2465 = vmatpush.msra.mxu0 %v1747
        %2466 = vmatpush.msra.mxu0 %v1740
        %2467 = vmatpush.msra.mxu0 %v1733
        %2468 = vmatpush.msra.mxu0 %v1726
        %2469 = vmatpush.msra.mxu0 %v1719
        %2470 = vmatpush.msra.mxu0 %v1712
        %2471 = vmatpush.msra.mxu0 %v1705
        %2472 = vmatpush.msra.mxu0 %v1698
        %2473 = vmatpush.msra.mxu0 %v1691
        %2474 = vmatmul.f32.gmra.mxu0 %v1571
        %v2475 = vpop.f32.mrf.mxu0
        %v2476 = vadd.f32 %v2456, %v2475
        %2477 = vdwg.mxu0
        %2478 = vmatpush.msra.mxu0 %v1908
        %2479 = vmatpush.msra.mxu0 %v1901
        %2480 = vmatpush.msra.mxu0 %v1894
        %2481 = vmatpush.msra.mxu0 %v1887
        %2482 = vmatpush.msra.mxu0 %v1880
        %2483 = vmatpush.msra.mxu0 %v1873
        %2484 = vmatpush.msra.mxu0 %v1866
        %2485 = vmatpush.msra.mxu0 %v1859
        %2486 = vmatpush.msra.mxu0 %v1852
        %2487 = vmatpush.msra.mxu0 %v1845
        %2488 = vmatpush.msra.mxu0 %v1838
        %2489 = vmatpush.msra.mxu0 %v1831
        %2490 = vmatpush.msra.mxu0 %v1824
        %2491 = vmatpush.msra.mxu0 %v1817
        %2492 = vmatpush.msra.mxu0 %v1810
        %2493 = vmatpush.msra.mxu0 %v1803
        %2494 = vmatmul.f32.gmra.mxu0 %v1572
        %v2495 = vpop.f32.mrf.mxu0
        %v2496 = vadd.f32 %v2476, %v2495
        %2497 = vdwg.mxu0
        %2498 = vmatpush.msra.mxu0 %v2020
        %2499 = vmatpush.msra.mxu0 %v2013
        %2500 = vmatpush.msra.mxu0 %v2006
        %2501 = vmatpush.msra.mxu0 %v1999
        %2502 = vmatpush.msra.mxu0 %v1992
        %2503 = vmatpush.msra.mxu0 %v1985
        %2504 = vmatpush.msra.mxu0 %v1978
        %2505 = vmatpush.msra.mxu0 %v1971
        %2506 = vmatpush.msra.mxu0 %v1964
        %2507 = vmatpush.msra.mxu0 %v1957
        %2508 = vmatpush.msra.mxu0 %v1950
        %2509 = vmatpush.msra.mxu0 %v1943
        %2510 = vmatpush.msra.mxu0 %v1936
        %2511 = vmatpush.msra.mxu0 %v1929
        %2512 = vmatpush.msra.mxu0 %v1922
        %2513 = vmatpush.msra.mxu0 %v1915
        %2514 = vmatmul.f32.gmra.mxu0 %v1573
        %v2515 = vpop.f32.mrf.mxu0
        %v2516 = vadd.f32 %v2496, %v2515
        %2517 = vdwg.mxu0
        %2518 = vmatpush.msra.mxu0 %v1685
        %2519 = vmatpush.msra.mxu0 %v1678
        %2520 = vmatpush.msra.mxu0 %v1671
        %2521 = vmatpush.msra.mxu0 %v1664
        %2522 = vmatpush.msra.mxu0 %v1657
        %2523 = vmatpush.msra.mxu0 %v1650
        %2524 = vmatpush.msra.mxu0 %v1643
        %2525 = vmatpush.msra.mxu0 %v1636
        %2526 = vmatpush.msra.mxu0 %v1629
        %2527 = vmatpush.msra.mxu0 %v1622
        %2528 = vmatpush.msra.mxu0 %v1615
        %2529 = vmatpush.msra.mxu0 %v1608
        %2530 = vmatpush.msra.mxu0 %v1601
        %2531 = vmatpush.msra.mxu0 %v1594
        %2532 = vmatpush.msra.mxu0 %v1587
        %2533 = vmatpush.msra.mxu0 %v1580
        %2534 = vmatmul.f32.gmra.mxu0 %v1570
        %v2535 = vpop.f32.mrf.mxu0
        %v2536 = vadd.f32 %v2030, %v2535
        %2537 = vdwg.mxu0
        %2538 = vmatpush.msra.mxu0 %v1797
        %2539 = vmatpush.msra.mxu0 %v1790
        %2540 = vmatpush.msra.mxu0 %v1783
        %2541 = vmatpush.msra.mxu0 %v1776
        %2542 = vmatpush.msra.mxu0 %v1769
        %2543 = vmatpush.msra.mxu0 %v1762
        %2544 = vmatpush.msra.mxu0 %v1755
        %2545 = vmatpush.msra.mxu0 %v1748
        %2546 = vmatpush.msra.mxu0 %v1741
        %2547 = vmatpush.msra.mxu0 %v1734
        %2548 = vmatpush.msra.mxu0 %v1727
        %2549 = vmatpush.msra.mxu0 %v1720
        %2550 = vmatpush.msra.mxu0 %v1713
        %2551 = vmatpush.msra.mxu0 %v1706
        %2552 = vmatpush.msra.mxu0 %v1699
        %2553 = vmatpush.msra.mxu0 %v1692
        %2554 = vmatmul.f32.gmra.mxu0 %v1571
        %v2555 = vpop.f32.mrf.mxu0
        %v2556 = vadd.f32 %v2536, %v2555
        %2557 = vdwg.mxu0
        %2558 = vmatpush.msra.mxu0 %v1909
        %2559 = vmatpush.msra.mxu0 %v1902
        %2560 = vmatpush.msra.mxu0 %v1895
        %2561 = vmatpush.msra.mxu0 %v1888
        %2562 = vmatpush.msra.mxu0 %v1881
        %2563 = vmatpush.msra.mxu0 %v1874
        %2564 = vmatpush.msra.mxu0 %v1867
        %2565 = vmatpush.msra.mxu0 %v1860
        %2566 = vmatpush.msra.mxu0 %v1853
        %2567 = vmatpush.msra.mxu0 %v1846
        %2568 = vmatpush.msra.mxu0 %v1839
        %2569 = vmatpush.msra.mxu0 %v1832
        %2570 = vmatpush.msra.mxu0 %v1825
        %2571 = vmatpush.msra.mxu0 %v1818
        %2572 = vmatpush.msra.mxu0 %v1811
        %2573 = vmatpush.msra.mxu0 %v1804
        %2574 = vmatmul.f32.gmra.mxu0 %v1572
        %v2575 = vpop.f32.mrf.mxu0
        %v2576 = vadd.f32 %v2556, %v2575
        %2577 = vdwg.mxu0
        %2578 = vmatpush.msra.mxu0 %v2021
        %2579 = vmatpush.msra.mxu0 %v2014
        %2580 = vmatpush.msra.mxu0 %v2007
        %2581 = vmatpush.msra.mxu0 %v2000
        %2582 = vmatpush.msra.mxu0 %v1993
        %2583 = vmatpush.msra.mxu0 %v1986
        %2584 = vmatpush.msra.mxu0 %v1979
        %2585 = vmatpush.msra.mxu0 %v1972
        %2586 = vmatpush.msra.mxu0 %v1965
        %2587 = vmatpush.msra.mxu0 %v1958
        %2588 = vmatpush.msra.mxu0 %v1951
        %2589 = vmatpush.msra.mxu0 %v1944
        %2590 = vmatpush.msra.mxu0 %v1937
        %2591 = vmatpush.msra.mxu0 %v1930
        %2592 = vmatpush.msra.mxu0 %v1923
        %2593 = vmatpush.msra.mxu0 %v1916
        %2594 = vmatmul.f32.gmra.mxu0 %v1573
        %v2595 = vpop.f32.mrf.mxu0
        %v2596 = vadd.f32 %v2576, %v2595
        %2597 = vdwg.mxu0
        %2598 = vst [vmem:[%s323] sm:$0xff] %v2116
        %2599 = vst [vmem:[%s323 + $0x8] sm:$0xff] %v2196
        %2600 = vst [vmem:[%s323 + $0x10] sm:$0xff] %v2276
        %2601 = vst [vmem:[%s323 + $0x18] sm:$0xff] %v2356
        %2602 = vst [vmem:[%s323 + $0x20] sm:$0xff] %v2436
        %2603 = vst [vmem:[%s323 + $0x28] sm:$0xff] %v2516
        %vm2604 = vcmask 261120
        %2605 = vst.msk [vmem:[%s323 + $0x30] sm:$0xff] %vm2604, %v2596
        %s2606 = sand.u32 %s225, 1
        %s2607 = scalar_lea.sflag [#allocation3], %s2606
        %s2608 = sand.u32 %s225, 1
        %s2609 = smul.addr %s2608, 56
        %s2610 = scalar_lea.vmem [#allocation2], %s2609
        // Predicated region
        $region57: #{mlp_forward.1} parent=55 // pred_check
          %p2611 = pneg %p235
        $region58: #{mlp_forward.1} parent=55 // pred_check_branch
          %2613 = sbr.rel (%p2611) target = $region60
        $region59: #{mlp_forward.1} parent=55 // pred_region
          %2615 = vsyncadd %s2607, 0
          %s2616 = smul.addr %s23, 7
          %s2617 = smul.addr %s2616, 8
          %s2618 = scalar_lea.hbm %s9, %s2617
          %s2620 = sshll.u32 %s2610, 4
          %s2621 = int_to_ptr.vmem [resolvable:$true] %s2620
          %s2622 = sshll.u32 %s2618, 4
          %s2623 = int_to_ptr.hbm [resolvable:$true] %s2622
          %2625 = dma.vmem_to_hbm [thread:$0]  %s2621, 896, %s2623, %s2607
        $region60: #{mlp_forward.1} parent=55 // pred_fallthru
          _
      $region56: #{mlp_forward.1} parent=5 // pred_fallthru
        _
      %p2626 = scmp.le.s32.totalorder 2, %s18
      // Predicated region
      $region61: #{mlp_forward.1} parent=5 // pred_check
        %p2627 = pneg %p2626
      $region62: #{mlp_forward.1} parent=5 // pred_check_branch
        %2629 = sbr.rel (%p2627) target = $region64
      $region63: #{mlp_forward.1} parent=5 // pred_region
        %s2630 = ssub.s32 %s18, 2
        // Predicated region
        $region65: #{mlp_forward.1} parent=63 // pred_check
          %p2631 = pneg %p241
        $region66: #{mlp_forward.1} parent=63 // pred_check_branch
          %2633 = sbr.rel (%p2631) target = $region68
        $region67: #{mlp_forward.1} parent=63 // pred_region
          %s2634 = sand.u32 %s226, 1
          %s2635 = scalar_lea.sflag [#allocation3], %s2634
          %s2636 = sand.u32 %s226, 1
          %s2637 = smul.addr %s2636, 56
          %s2638 = scalar_lea.vmem [#allocation2], %s2637
          %2640 = dma.done %s2635, 896
        $region68: #{mlp_forward.1} parent=63 // pred_fallthru
          _
      $region64: #{mlp_forward.1} parent=5 // pred_fallthru
        _
    $region6: #{mlp_forward.1} parent=1 // loop_footer
      %s22 = sadd.s32 1, %s18
    $region7: #{mlp_forward.1} parent=1 // loop_footer_branch
      %17 = sbr.rel target = $region3
    $region8: #{mlp_forward.1} parent=1 // loop_exit
      _
    %2641 = vsyncpa [#allocation3], 1
    %s2642 = scalar_lea.sflag [#allocation3], 1
    %2643 = vsyncpa %s2642, 1

</llo_original>
